<compile_context>
chip_gen: v7x
topology: tpu7x:2x2x1
jax: 0.10.0
libtpu: 0.0.40
codegen_flags: <defaults>
</compile_context>

<pallas_src>
import jax
import jax.numpy as jnp
from jax.experimental import pallas as pl
from jax.experimental.pallas import tpu as pltpu

NEG_SLOPE = 0.01  # nn.LeakyReLU() default

# Logical dims and lane-padded dims.
D_IN, D_H1, D_H2, D_OUT = 100, 200, 500, 1000
D_INP, D_H1P, D_H2P, D_OUTP = 128, 256, 512, 1024
B_OFF2 = D_H1P
B_OFF3 = D_H1P + D_H2P
B_TOT = D_H1P + D_H2P + D_OUTP


def _leaky_relu(x):
    return jnp.where(x > 0, x, NEG_SLOPE * x)


def _round_up(n, m):
    return ((n + m - 1) // m) * m


def generator_kernel(x_ref, w1_ref, w2_ref, w3_ref, b_ref, o_ref):
    # x tile (TB, 128) already bf16; matmuls run bf16 x bf16 with f32 accumulation.
    x = x_ref[...]

    # layer1: Linear(100->200) + LeakyReLU   (padded 128->256)
    h1 = jnp.dot(x, w1_ref[...], preferred_element_type=jnp.float32)
    h1 = _leaky_relu(h1 + b_ref[:, 0:B_OFF2])

    # layer2: Linear(200->500) + LeakyReLU   (padded 256->512)
    h2 = jnp.dot(h1.astype(jnp.bfloat16), w2_ref[...],
                 preferred_element_type=jnp.float32)
    h2 = _leaky_relu(h2 + b_ref[:, B_OFF2:B_OFF3])

    # layer3: Linear(500->1000)              (padded 512->1024)
    h3 = jnp.dot(h2.astype(jnp.bfloat16), w3_ref[...],
                 preferred_element_type=jnp.float32)
    h3 = h3 + b_ref[:, B_OFF3:B_TOT]

    # Tanh, stored directly at the logical 1000-col width (no wrapper col slice).
    o_ref[...] = jnp.tanh(h3[:, :D_OUT]).astype(o_ref.dtype)


def prepare_params(params, weight_dtype=jnp.bfloat16):
    """Zero-pad weights/biases to lane-multiples of 128 and cast weights to bf16.

    Weights are (in, out) so the kernel computes x @ W + b, identical to
    PyTorch's x @ W.T with W of shape (out, in). Zero padding of the extra
    rows/cols is exact: padded input columns hit zero weight rows, and padded
    hidden columns carry 0 through LeakyReLU into zero weight rows downstream.
    """
    def pad_w(w, rp, cp):
        r, c = w.shape
        return jnp.pad(w, ((0, rp - r), (0, cp - c))).astype(weight_dtype)

    def pad_b(b, cp):
        return jnp.pad(b, (0, cp - b.shape[0])).astype(jnp.float32)

    return {
        "w1": pad_w(params["w1"], D_INP, D_H1P),
        "w2": pad_w(params["w2"], D_H1P, D_H2P),
        "w3": pad_w(params["w3"], D_H2P, D_OUTP),
        "bcat": jnp.concatenate(
            [pad_b(params["b1"], D_H1P),
             pad_b(params["b2"], D_H2P),
             pad_b(params["b3"], D_OUTP)]
        ).reshape(1, B_TOT),
    }


def generator_forward(x, padded_params, *, block_b=512, out_dtype=jnp.float32):
    """x: (B, 100) float32.  padded_params: output of prepare_params().

    Returns (B, 1000) in out_dtype (float32 default; pass jnp.bfloat16 to halve
    output HBM writeback if the consumer tolerates it).
    """
    B = x.shape[0]
    block_b = max(8, _round_up(block_b, 8))

    # Batch tile: multiple of 8 (sublane), capped at block_b rows per grid step.
    TB = min(block_b, _round_up(B, 8))
    # Prefer >= 2 grid steps when the batch allows, so the "parallel" axis can
    # actually shard across the two v7x TensorCores.
    if B > 8:
        TB = min(TB, _round_up(pl.cdiv(B, 2), 8))
    Bp = _round_up(B, TB)

    # Pad batch and input-feature dims with zeros (exact) and cast to bf16 in
    # the wrapper (fuses with the pad) so the x DMA is half-width.
    xp = jnp.pad(x.astype(jnp.bfloat16), ((0, Bp - B), (0, D_INP - D_IN)))

    w1, w2, w3 = padded_params["w1"], padded_params["w2"], padded_params["w3"]
    bcat = padded_params["bcat"]

    flops = 2 * Bp * (D_INP * D_H1P + D_H1P * D_H2P + D_H2P * D_OUTP)
    bytes_accessed = (
        int(xp.size) * xp.dtype.itemsize
        + sum(int(w.size) * w.dtype.itemsize for w in (w1, w2, w3))
        + int(bcat.size) * bcat.dtype.itemsize
        + Bp * D_OUT * jnp.dtype(out_dtype).itemsize
    )

    out = pl.pallas_call(
        generator_kernel,
        out_shape=jax.ShapeDtypeStruct((Bp, D_OUT), out_dtype),
        grid_spec=pl.GridSpec(
            grid=(Bp // TB,),
            in_specs=[
                # Activations: tiled along the batch axis.
                pl.BlockSpec((TB, D_INP), lambda i: (i, 0)),
                # Weights / biases: constant block index -> DMA'd once,
                # VMEM-resident across all batch tiles.
                pl.BlockSpec((D_INP, D_H1P), lambda i: (0, 0)),
                pl.BlockSpec((D_H1P, D_H2P), lambda i: (0, 0)),
                pl.BlockSpec((D_H2P, D_OUTP), lambda i: (0, 0)),
                pl.BlockSpec((1, B_TOT), lambda i: (0, 0)),
            ],
            # Output at the logical 1000-col width (7/8 lane groups dense).
            out_specs=pl.BlockSpec((TB, D_OUT), lambda i: (i, 0)),
        ),
        compiler_params=pltpu.CompilerParams(
            # Independent batch tiles: shard across both TensorCores on v7x.
            dimension_semantics=("parallel",),
            # Only needed when very large tiles are requested (v5e default is 16 MiB).
            vmem_limit_bytes=(28 * 1024 * 1024) if TB > 512 else None,
        ),
        cost_estimate=pl.CostEstimate(
            flops=flops,
            transcendentals=Bp * D_OUT,       # tanh
            bytes_accessed=bytes_accessed,
        ),
    )(xp, w1, w2, w3, bcat)

    # Only a row slice remains, and only when the batch had to be padded.
    return out if Bp == B else out[:B]


def init_params(key):
    """Deterministic init matching nn.Linear's U(-1/sqrt(fan_in), 1/sqrt(fan_in))."""
    dims = [(D_IN, D_H1), (D_H1, D_H2), (D_H2, D_OUT)]
    params = {}
    keys = jax.random.split(key, 2 * len(dims))
    for idx, (fan_in, fan_out) in enumerate(dims):
        bound = 1.0 / (fan_in ** 0.5)
        params[f"w{idx + 1}"] = jax.random.uniform(
            keys[2 * idx], (fan_in, fan_out), jnp.float32, -bound, bound)
        params[f"b{idx + 1}"] = jax.random.uniform(
            keys[2 * idx + 1], (fan_out,), jnp.float32, -bound, bound)
    return params


def reference_forward(x, params):
    """Full-f32 reference (matches PyTorch forward semantics)."""
    h1 = _leaky_relu(x @ params["w1"] + params["b1"])
    h2 = _leaky_relu(h1 @ params["w2"] + params["b2"])
    h3 = h2 @ params["w3"] + params["b3"]
    return jnp.tanh(h3)


if __name__ == "__main__":
    key = jax.random.PRNGKey(0)
    k_params, k_x1, k_x2 = jax.random.split(key, 3)

    params = init_params(k_params)
    padded = prepare_params(params)  # one-time weight padding + bf16 cast

    # Tolerances relaxed vs. pure-f32 because weights/activations feed the MXU
    # in bf16 (f32 accumulation); outputs are bounded by tanh.

    # Small-batch check (single grid step, f32 output).
    x = jax.random.normal(k_x1, (8, D_IN), dtype=jnp.float32)
    out = jax.block_until_ready(generator_forward(x, padded))
    ref = reference_forward(x, params)
    assert out.shape == (8, D_OUT)
    assert out.dtype == jnp.float32
    assert jnp.allclose(out, ref, atol=2e-2, rtol=2e-2), "mismatch vs reference (B=8)"

    # Multi-tile check: batch tiling + batch padding (grid=(3,)) + bf16 writeback.
    x2 = jax.random.normal(k_x2, (272, D_IN), dtype=jnp.float32)
    out2 = jax.block_until_ready(
        generator_forward(x2, padded, block_b=128, out_dtype=jnp.bfloat16))
    ref2 = reference_forward(x2, params)
    assert out2.shape == (272, D_OUT)
    assert out2.dtype == jnp.bfloat16
    assert jnp.allclose(out2.astype(jnp.float32), ref2, atol=3e-2, rtol=3e-2), \
        "mismatch vs reference (B=272)"

    # TODO(synk): self.bn (BatchNorm1d(1)) is unused in the PyTorch forward and is omitted.
    print("KERNEL_OK")
</pallas_src>

<mosaic_0001>
module attributes {stable_mosaic.version = 11 : i64} {
  func.func @generator_kernel(%arg0: i32, %arg1: memref<8x128xbf16, #tpu.memory_space<vmem>>, %arg2: memref<128x256xbf16, #tpu.memory_space<vmem>>, %arg3: memref<256x512xbf16, #tpu.memory_space<vmem>>, %arg4: memref<512x1024xbf16, #tpu.memory_space<vmem>>, %arg5: memref<1x1792xf32, #tpu.memory_space<vmem>>, %arg6: memref<8x1000xf32, #tpu.memory_space<vmem>>) attributes {dimension_semantics = [#tpu.dimension_semantics<parallel>], iteration_bounds = array<i64: 1>, scalar_prefetch = 0 : i64, scratch_operands = 0 : i64, tpu.core_type = #tpu.core_type<tc>, window_params = [{transform_indices = @transform_0, window_bounds = array<i64: 8, 128>}, {pipeline_mode = #tpu.pipeline_mode<synchronous>, transform_indices = @transform_1, window_bounds = array<i64: 128, 256>}, {pipeline_mode = #tpu.pipeline_mode<synchronous>, transform_indices = @transform_2, window_bounds = array<i64: 256, 512>}, {pipeline_mode = #tpu.pipeline_mode<synchronous>, transform_indices = @transform_3, window_bounds = array<i64: 512, 1024>}, {pipeline_mode = #tpu.pipeline_mode<synchronous>, transform_indices = @transform_4, window_bounds = array<i64: 1, 1792>}, {transform_indices = @transform_5, window_bounds = array<i64: 8, 1000>}]} {
    %c0 = arith.constant 0 : index
    %c0_0 = arith.constant 0 : index
    %0 = vector.load %arg1[%c0, %c0_0] : memref<8x128xbf16, #tpu.memory_space<vmem>>, vector<8x128xbf16>
    %c0_1 = arith.constant 0 : index
    %c0_2 = arith.constant 0 : index
    %1 = vector.load %arg2[%c0_1, %c0_2] : memref<128x256xbf16, #tpu.memory_space<vmem>>, vector<128x256xbf16>
    %cst = arith.constant dense<0.000000e+00> : vector<8x256xf32>
    %2 = tpu.matmul %0, %1, %cst {dimension_numbers = #tpu.dot_dimension_numbers<[1], [0], [0], [1], [0, 0, 1, 1], [], []>} : vector<8x128xbf16>, vector<128x256xbf16>, vector<8x256xf32> -> vector<8x256xf32>
    %c0_3 = arith.constant 0 : index
    %c0_4 = arith.constant 0 : index
    %3 = vector.load %arg5[%c0_3, %c0_4] : memref<1x1792xf32, #tpu.memory_space<vmem>>, vector<1x256xf32>
    %4 = vector.broadcast %3 : vector<1x256xf32> to vector<8x256xf32>
    %5 = arith.addf %2, %4 : vector<8x256xf32>
    %cst_5 = arith.constant 0.000000e+00 : f32
    %6 = vector.broadcast %cst_5 : f32 to vector<8x256xf32>
    %7 = arith.cmpf ogt, %5, %6 : vector<8x256xf32>
    %cst_6 = arith.constant 0.00999999977 : f32
    %8 = vector.broadcast %cst_6 : f32 to vector<8x256xf32>
    %9 = arith.mulf %8, %5 : vector<8x256xf32>
    %10 = arith.select %7, %5, %9 : vector<8x256xi1>, vector<8x256xf32>
    %11 = arith.truncf %10 : vector<8x256xf32> to vector<8x256xbf16>
    %c0_7 = arith.constant 0 : index
    %c0_8 = arith.constant 0 : index
    %12 = vector.load %arg3[%c0_7, %c0_8] : memref<256x512xbf16, #tpu.memory_space<vmem>>, vector<256x512xbf16>
    %cst_9 = arith.constant dense<0.000000e+00> : vector<8x512xf32>
    %13 = tpu.matmul %11, %12, %cst_9 {dimension_numbers = #tpu.dot_dimension_numbers<[1], [0], [0], [1], [0, 0, 1, 1], [], []>} : vector<8x256xbf16>, vector<256x512xbf16>, vector<8x512xf32> -> vector<8x512xf32>
    %c0_10 = arith.constant 0 : index
    %c256 = arith.constant 256 : index
    %14 = vector.load %arg5[%c0_10, %c256] : memref<1x1792xf32, #tpu.memory_space<vmem>>, vector<1x512xf32>
    %15 = vector.broadcast %14 : vector<1x512xf32> to vector<8x512xf32>
    %16 = arith.addf %13, %15 : vector<8x512xf32>
    %cst_11 = arith.constant 0.000000e+00 : f32
    %17 = vector.broadcast %cst_11 : f32 to vector<8x512xf32>
    %18 = arith.cmpf ogt, %16, %17 : vector<8x512xf32>
    %cst_12 = arith.constant 0.00999999977 : f32
    %19 = vector.broadcast %cst_12 : f32 to vector<8x512xf32>
    %20 = arith.mulf %19, %16 : vector<8x512xf32>
    %21 = arith.select %18, %16, %20 : vector<8x512xi1>, vector<8x512xf32>
    %22 = arith.truncf %21 : vector<8x512xf32> to vector<8x512xbf16>
    %c0_13 = arith.constant 0 : index
    %c0_14 = arith.constant 0 : index
    %23 = vector.load %arg4[%c0_13, %c0_14] : memref<512x1024xbf16, #tpu.memory_space<vmem>>, vector<512x1024xbf16>
    %cst_15 = arith.constant dense<0.000000e+00> : vector<8x1024xf32>
    %24 = tpu.matmul %22, %23, %cst_15 {dimension_numbers = #tpu.dot_dimension_numbers<[1], [0], [0], [1], [0, 0, 1, 1], [], []>} : vector<8x512xbf16>, vector<512x1024xbf16>, vector<8x1024xf32> -> vector<8x1024xf32>
    %c0_16 = arith.constant 0 : index
    %c768 = arith.constant 768 : index
    %25 = vector.load %arg5[%c0_16, %c768] : memref<1x1792xf32, #tpu.memory_space<vmem>>, vector<1x1024xf32>
    %26 = vector.broadcast %25 : vector<1x1024xf32> to vector<8x1024xf32>
    %27 = arith.addf %24, %26 : vector<8x1024xf32>
    %28 = vector.extract_strided_slice %27 {offsets = [0, 0], sizes = [8, 1000], strides = [1, 1]} : vector<8x1024xf32> to vector<8x1000xf32>
    %29 = math.tanh %28 : vector<8x1000xf32>
    %c0_17 = arith.constant 0 : index
    %c0_18 = arith.constant 0 : index
    %30 = vector.load %arg6[%c0_17, %c0_18] : memref<8x1000xf32, #tpu.memory_space<vmem>>, vector<8x1000xf32>
    tpu.vector_store %arg6[%c0_17, %c0_18], %29 {strides = array<i32>} : memref<8x1000xf32, #tpu.memory_space<vmem>>, vector<8x1000xf32>,
    return
  }
  func.func @transform_0(%arg0: i32) -> (i32, i32) {
    %c0_i32 = arith.constant 0 : i32
    %c0_i32_0 = arith.constant 0 : i32
    return %arg0, %c0_i32 : i32, i32
  }
  func.func @transform_1(%arg0: i32) -> (i32, i32) {
    %c0_i32 = arith.constant 0 : i32
    %c0_i32_0 = arith.constant 0 : i32
    %c0_i32_1 = arith.constant 0 : i32
    return %c0_i32, %c0_i32_0 : i32, i32
  }
  func.func @transform_2(%arg0: i32) -> (i32, i32) {
    %c0_i32 = arith.constant 0 : i32
    %c0_i32_0 = arith.constant 0 : i32
    %c0_i32_1 = arith.constant 0 : i32
    return %c0_i32, %c0_i32_0 : i32, i32
  }
  func.func @transform_3(%arg0: i32) -> (i32, i32) {
    %c0_i32 = arith.constant 0 : i32
    %c0_i32_0 = arith.constant 0 : i32
    %c0_i32_1 = arith.constant 0 : i32
    return %c0_i32, %c0_i32_0 : i32, i32
  }
  func.func @transform_4(%arg0: i32) -> (i32, i32) {
    %c0_i32 = arith.constant 0 : i32
    %c0_i32_0 = arith.constant 0 : i32
    %c0_i32_1 = arith.constant 0 : i32
    return %c0_i32, %c0_i32_0 : i32, i32
  }
  func.func @transform_5(%arg0: i32) -> (i32, i32) {
    %c0_i32 = arith.constant 0 : i32
    %c0_i32_0 = arith.constant 0 : i32
    return %arg0, %c0_i32 : i32, i32
  }
}

</mosaic_0001>

<llo_original>
// kernel: tpu_custom_call.1
$region0: #{tpu_custom_call.1}
  #allocation0 [shape = 'u32[]', space=smem, size = 0x4, offset = 0x4, fixed_abs, tag = 'smem constant byte address 0x4 - core index']
  #allocation1 [shape = 'u32[144,128]{1,0:T(1,128)}', space=vmem, size = 0x12000, scoped, tag = 'internal scratch']
  %s0 = inlined_call_operand.hbm [shape: bf16[8,128], index: 0, kind: input, shape index: {}]
  %s1 = inlined_call_operand.hbm [shape: bf16[128,256], index: 1, kind: input, shape index: {}]
  %s2 = inlined_call_operand.hbm [shape: bf16[256,512], index: 2, kind: input, shape index: {}]
  %s3 = inlined_call_operand.hbm [shape: bf16[512,1024], index: 3, kind: input, shape index: {}]
  %s4 = inlined_call_operand.vmem [shape: f32[1,1792], index: 4, kind: input, shape index: {}]
  %s5 = inlined_call_operand.hbm [shape: f32[8,1000], index: 5, kind: output, shape index: {}]
  %s6 = sld [smem:[#allocation0]]
  $region46: #{tpu_custom_call.1} parent=0
    _
  %s8 = ssub.s32 1, %s6
  %s9 = scalar_select 0, %s8, %s6
  $region1: #{tpu_custom_call.1} parent=0
    #allocation2 [shape = 'u8[2048]{0}', space=vmem, size = 0x800, scoped, tag = 'input window, operand 0, single buffered']
    #allocation3 [shape = 's32[1]{0}', space=sflag, size = 0x4, scoped, tag = 'scoped memory for tpu_custom_call.1']
    #allocation4 [shape = 's32[1]{0}', space=sflag, size = 0x4, scoped, tag = 'scoped memory for tpu_custom_call.1']
    #allocation5 [shape = 'u8[65536]{0}', space=vmem, size = 0x10000, scoped, tag = 'input window, operand 1, single buffered']
    #allocation6 [shape = 's32[1]{0}', space=sflag, size = 0x4, scoped, tag = 'scoped memory for tpu_custom_call.1']
    #allocation7 [shape = 'u8[262144]{0}', space=vmem, size = 0x40000, scoped, tag = 'input window, operand 2, single buffered']
    #allocation8 [shape = 'u8[1048576]{0}', space=vmem, size = 0x100000, scoped, tag = 'input window, operand 3, single buffered']
    #allocation9 [shape = 's32[1]{0}', space=sflag, size = 0x4, scoped, tag = 'scoped memory for tpu_custom_call.1']
    #allocation10 [shape = 'u8[32768]{0}', space=vmem, size = 0x8000, scoped, tag = 'output window, operand 0, single buffered']
    %10 = vsyncpa [#allocation3], 0
    %11 = vsyncpa [#allocation6], 0
    %12 = vsyncpa [#allocation9], 0
    %13 = vsyncpa [#allocation4], 0
    // Predicated region
    $region2: #{tpu_custom_call.1} parent=1 // pred_check
      _
    $region3: #{tpu_custom_call.1} parent=1 // pred_check_branch
      %15 = sbr.rel (0) target = $region5
    $region4: #{tpu_custom_call.1} parent=1 // pred_region
      %s17 = ssub.s32 64, 64
      %18 = vsyncadd [#allocation3], %s17
      %s20 = sshll.u32 [#allocation2], 4
      %s21 = int_to_ptr.vmem [resolvable:$true] %s20
      %23 = dma.hbm_to_vmem [thread:$0]  %s0, 64, %s21, [#allocation3]
    $region5: #{tpu_custom_call.1} parent=1 // pred_fallthru
      _
    // Predicated region
    $region6: #{tpu_custom_call.1} parent=1 // pred_check
      _
    $region7: #{tpu_custom_call.1} parent=1 // pred_check_branch
      %25 = sbr.rel (0) target = $region9
    $region8: #{tpu_custom_call.1} parent=1 // pred_region
      %s27 = ssub.s32 2048, 2048
      %28 = vsyncadd [#allocation6], %s27
      %s29 = sshll.u32 [#allocation5], 4
      %s30 = int_to_ptr.vmem [resolvable:$true] %s29
      %35 = dma.hbm_to_vmem [thread:$0]  %s1, 2048, %s30, [#allocation6], 128, 128, 8
    $region9: #{tpu_custom_call.1} parent=1 // pred_fallthru
      _
    // Predicated region
    $region10: #{tpu_custom_call.1} parent=1 // pred_check
      _
    $region11: #{tpu_custom_call.1} parent=1 // pred_check_branch
      %37 = sbr.rel (0) target = $region13
    $region12: #{tpu_custom_call.1} parent=1 // pred_region
      %s39 = ssub.s32 8192, 8192
      %40 = vsyncadd [#allocation6], %s39
      %s41 = sshll.u32 [#allocation7], 4
      %s42 = int_to_ptr.vmem [resolvable:$true] %s41
      %47 = dma.hbm_to_vmem [thread:$0]  %s2, 8192, %s42, [#allocation6], 256, 256, 16
    $region13: #{tpu_custom_call.1} parent=1 // pred_fallthru
      _
    // Predicated region
    $region14: #{tpu_custom_call.1} parent=1 // pred_check
      _
    $region15: #{tpu_custom_call.1} parent=1 // pred_check_branch
      %49 = sbr.rel (0) target = $region17
    $region16: #{tpu_custom_call.1} parent=1 // pred_region
      %s51 = ssub.s32 32768, 32768
      %52 = vsyncadd [#allocation9], %s51
      %s53 = sshll.u32 [#allocation8], 4
      %s54 = int_to_ptr.vmem [resolvable:$true] %s53
      %59 = dma.hbm_to_vmem [thread:$0]  %s3, 32768, %s54, [#allocation9], 512, 512, 32
    $region17: #{tpu_custom_call.1} parent=1 // pred_fallthru
      _
    // Predicated region
    $region18: #{tpu_custom_call.1} parent=1 // pred_check
      _
    $region19: #{tpu_custom_call.1} parent=1 // pred_check_branch
      %61 = sbr.rel (0) target = $region21
    $region20: #{tpu_custom_call.1} parent=1 // pred_region
      _
    $region21: #{tpu_custom_call.1} parent=1 // pred_fallthru
      _
    // Predicated region
    $region22: #{tpu_custom_call.1} parent=1 // pred_check
      _
    $region23: #{tpu_custom_call.1} parent=1 // pred_check_branch
      %63 = sbr.rel (0) target = $region25
    $region24: #{tpu_custom_call.1} parent=1 // pred_region
      %64 = dma.done [#allocation3], 64
    $region25: #{tpu_custom_call.1} parent=1 // pred_fallthru
      _
    // Predicated region
    $region26: #{tpu_custom_call.1} parent=1 // pred_check
      _
    $region27: #{tpu_custom_call.1} parent=1 // pred_check_branch
      %66 = sbr.rel (0) target = $region29
    $region28: #{tpu_custom_call.1} parent=1 // pred_region
      %67 = dma.done [#allocation6], 2048
    $region29: #{tpu_custom_call.1} parent=1 // pred_fallthru
      _
    // Predicated region
    $region30: #{tpu_custom_call.1} parent=1 // pred_check
      _
    $region31: #{tpu_custom_call.1} parent=1 // pred_check_branch
      %69 = sbr.rel (0) target = $region33
    $region32: #{tpu_custom_call.1} parent=1 // pred_region
      %70 = dma.done [#allocation6], 8192
    $region33: #{tpu_custom_call.1} parent=1 // pred_fallthru
      _
    // Predicated region
    $region34: #{tpu_custom_call.1} parent=1 // pred_check
      _
    $region35: #{tpu_custom_call.1} parent=1 // pred_check_branch
      %72 = sbr.rel (0) target = $region37
    $region36: #{tpu_custom_call.1} parent=1 // pred_region
      %73 = dma.done [#allocation9], 32768
    $region37: #{tpu_custom_call.1} parent=1 // pred_fallthru
      _
    %v75 = vld [vmem:[#allocation2] sm:$0xf]
    %v76 = vld [vmem:[#allocation5] sm:$0xff]
    %v77 = vld [vmem:[#allocation5 + $0x8] sm:$0xff]
    %v78 = vld [vmem:[#allocation5 + $0x10] sm:$0xff]
    %v79 = vld [vmem:[#allocation5 + $0x18] sm:$0xff]
    %v80 = vld [vmem:[#allocation5 + $0x20] sm:$0xff]
    %v81 = vld [vmem:[#allocation5 + $0x28] sm:$0xff]
    %v82 = vld [vmem:[#allocation5 + $0x30] sm:$0xff]
    %v83 = vld [vmem:[#allocation5 + $0x38] sm:$0xff]
    %v84 = vld [vmem:[#allocation5 + $0x40] sm:$0xff]
    %v85 = vld [vmem:[#allocation5 + $0x48] sm:$0xff]
    %v86 = vld [vmem:[#allocation5 + $0x50] sm:$0xff]
    %v87 = vld [vmem:[#allocation5 + $0x58] sm:$0xff]
    %v88 = vld [vmem:[#allocation5 + $0x60] sm:$0xff]
    %v89 = vld [vmem:[#allocation5 + $0x68] sm:$0xff]
    %v90 = vld [vmem:[#allocation5 + $0x70] sm:$0xff]
    %v91 = vld [vmem:[#allocation5 + $0x78] sm:$0xff]
    %v92 = vld [vmem:[%s4] sm:$0x3]
    %v94 = vlaneseq
    %v95 = vshrl.u32 %v94, 7
    %v96 = vsub.s32 0, %v95
    %v97 = vrot.slane %v92, %v96
    %v98 = vlaneseq
    %v99 = vshrl.u32 %v98, 7
    %v100 = vsub.s32 1, %v99
    %v101 = vrot.slane %v92, %v100
    %v120 = vunpack.c.l.b16 %v76
    %v121 = vunpack.c.h.b16 %v76
    %v122 = vunpack.c.l.b16 %v77
    %v123 = vunpack.c.h.b16 %v77
    %v124 = vunpack.c.l.b16 %v78
    %v125 = vunpack.c.h.b16 %v78
    %v126 = vunpack.c.l.b16 %v79
    %v127 = vunpack.c.h.b16 %v79
    %v128 = vunpack.c.l.b16 %v80
    %v129 = vunpack.c.h.b16 %v80
    %v130 = vunpack.c.l.b16 %v81
    %v131 = vunpack.c.h.b16 %v81
    %v132 = vunpack.c.l.b16 %v82
    %v133 = vunpack.c.h.b16 %v82
    %v134 = vunpack.c.l.b16 %v83
    %v135 = vunpack.c.h.b16 %v83
    %v136 = vunpack.c.l.b16 %v84
    %v137 = vunpack.c.h.b16 %v84
    %v138 = vunpack.c.l.b16 %v85
    %v139 = vunpack.c.h.b16 %v85
    %v140 = vunpack.c.l.b16 %v86
    %v141 = vunpack.c.h.b16 %v86
    %v142 = vunpack.c.l.b16 %v87
    %v143 = vunpack.c.h.b16 %v87
    %v144 = vunpack.c.l.b16 %v88
    %v145 = vunpack.c.h.b16 %v88
    %v146 = vunpack.c.l.b16 %v89
    %v147 = vunpack.c.h.b16 %v89
    %v148 = vunpack.c.l.b16 %v90
    %v149 = vunpack.c.h.b16 %v90
    %v150 = vunpack.c.l.b16 %v91
    %v151 = vunpack.c.h.b16 %v91
    %v152 = vpack.c.b16 %v122, %v120
    %v153 = vpack.c.b16 %v123, %v121
    %v154 = vpack.c.b16 %v126, %v124
    %v155 = vpack.c.b16 %v127, %v125
    %v156 = vpack.c.b16 %v130, %v128
    %v157 = vpack.c.b16 %v131, %v129
    %v158 = vpack.c.b16 %v134, %v132
    %v159 = vpack.c.b16 %v135, %v133
    %v160 = vpack.c.b16 %v138, %v136
    %v161 = vpack.c.b16 %v139, %v137
    %v162 = vpack.c.b16 %v142, %v140
    %v163 = vpack.c.b16 %v143, %v141
    %v164 = vpack.c.b16 %v146, %v144
    %v165 = vpack.c.b16 %v147, %v145
    %v166 = vpack.c.b16 %v150, %v148
    %v167 = vpack.c.b16 %v151, %v149
    %184 = vmatprep.subr.bf16.mxu0 %v153
    %185 = vmatpush1.bf16.msra.mxu0 %v152
    %186 = vmatprep.subr.bf16.mxu0 %v155
    %187 = vmatpush1.bf16.msra.mxu0 %v154
    %188 = vmatprep.subr.bf16.mxu0 %v157
    %189 = vmatpush1.bf16.msra.mxu0 %v156
    %190 = vmatprep.subr.bf16.mxu0 %v159
    %191 = vmatpush1.bf16.msra.mxu0 %v158
    %192 = vmatprep.subr.bf16.mxu0 %v161
    %193 = vmatpush1.bf16.msra.mxu0 %v160
    %194 = vmatprep.subr.bf16.mxu0 %v163
    %195 = vmatpush1.bf16.msra.mxu0 %v162
    %196 = vmatprep.subr.bf16.mxu0 %v165
    %197 = vmatpush1.bf16.msra.mxu0 %v164
    %198 = vmatprep.subr.bf16.mxu0 %v167
    %199 = vmatpush1.bf16.msra.mxu0 %v166
    %200 = vmatprep.subr.bf16.mxu0 0
    %201 = vmatpush1.bf16.msra.mxu0 0
    %202 = vmatprep.subr.bf16.mxu0 0
    %203 = vmatpush1.bf16.msra.mxu0 0
    %204 = vmatprep.subr.bf16.mxu0 0
    %205 = vmatpush1.bf16.msra.mxu0 0
    %206 = vmatprep.subr.bf16.mxu0 0
    %207 = vmatpush1.bf16.msra.mxu0 0
    %208 = vmatprep.subr.bf16.mxu0 0
    %209 = vmatpush1.bf16.msra.mxu0 0
    %210 = vmatprep.subr.bf16.mxu0 0
    %211 = vmatpush1.bf16.msra.mxu0 0
    %212 = vmatprep.subr.bf16.mxu0 0
    %213 = vmatpush1.bf16.msra.mxu0 0
    %214 = vmatprep.subr.bf16.mxu0 0
    %215 = vmatpush1.bf16.msra.mxu0 0
    %216 = vmatprep.mubr.bf16.mxu0 0
    %217 = vmatmul.mubr.bf16.gmra.mrb[0].mxu0 %v75
    %v218 = vpop.f32.mrb[0].mxu0
    %v219 = vadd.f32 %v97, %v218
    %v220 = vpop.f32.mrb[0].mxu0
    %v221 = vadd.f32 %v101, %v220
    %v222 = vpop.f32.mrb[0].mxu0
    %v223 = vpop.f32.mrb[0].mxu0
    %224 = vdwg.mxu0
    %vm225 = vcmp.gt.f32.partialorder %v219, 0.0
    %vm226 = vcmp.gt.f32.partialorder %v221, 0.0
    %v227 = vmul.f32 %v219, 0.01
    %v228 = vmul.f32 %v221, 0.01
    %v229 = vsel %vm225, %v219, %v227
    %v230 = vsel %vm226, %v221, %v228
    %v231 = vpack.c.bf16 %v229, %v229
    %v232 = vpack.c.bf16 %v230, %v230
    %v233 = vld [vmem:[#allocation7] sm:$0xff]
    %v234 = vld [vmem:[#allocation7 + $0x8] sm:$0xff]
    %v235 = vld [vmem:[#allocation7 + $0x10] sm:$0xff]
    %v236 = vld [vmem:[#allocation7 + $0x18] sm:$0xff]
    %v237 = vld [vmem:[#allocation7 + $0x20] sm:$0xff]
    %v238 = vld [vmem:[#allocation7 + $0x28] sm:$0xff]
    %v239 = vld [vmem:[#allocation7 + $0x30] sm:$0xff]
    %v240 = vld [vmem:[#allocation7 + $0x38] sm:$0xff]
    %v241 = vld [vmem:[#allocation7 + $0x40] sm:$0xff]
    %v242 = vld [vmem:[#allocation7 + $0x48] sm:$0xff]
    %v243 = vld [vmem:[#allocation7 + $0x50] sm:$0xff]
    %v244 = vld [vmem:[#allocation7 + $0x58] sm:$0xff]
    %v245 = vld [vmem:[#allocation7 + $0x60] sm:$0xff]
    %v246 = vld [vmem:[#allocation7 + $0x68] sm:$0xff]
    %v247 = vld [vmem:[#allocation7 + $0x70] sm:$0xff]
    %v248 = vld [vmem:[#allocation7 + $0x78] sm:$0xff]
    %v249 = vld [vmem:[#allocation7 + $0x80] sm:$0xff]
    %v250 = vld [vmem:[#allocation7 + $0x88] sm:$0xff]
    %v251 = vld [vmem:[#allocation7 + $0x90] sm:$0xff]
    %v252 = vld [vmem:[#allocation7 + $0x98] sm:$0xff]
    %v253 = vld [vmem:[#allocation7 + $0xa0] sm:$0xff]
    %v254 = vld [vmem:[#allocation7 + $0xa8] sm:$0xff]
    %v255 = vld [vmem:[#allocation7 + $0xb0] sm:$0xff]
    %v256 = vld [vmem:[#allocation7 + $0xb8] sm:$0xff]
    %v257 = vld [vmem:[#allocation7 + $0xc0] sm:$0xff]
    %v258 = vld [vmem:[#allocation7 + $0xc8] sm:$0xff]
    %v259 = vld [vmem:[#allocation7 + $0xd0] sm:$0xff]
    %v260 = vld [vmem:[#allocation7 + $0xd8] sm:$0xff]
    %v261 = vld [vmem:[#allocation7 + $0xe0] sm:$0xff]
    %v262 = vld [vmem:[#allocation7 + $0xe8] sm:$0xff]
    %v263 = vld [vmem:[#allocation7 + $0xf0] sm:$0xff]
    %v264 = vld [vmem:[#allocation7 + $0xf8] sm:$0xff]
    %v265 = vld [vmem:[#allocation7 + $0x100] sm:$0xff]
    %v266 = vld [vmem:[#allocation7 + $0x108] sm:$0xff]
    %v267 = vld [vmem:[#allocation7 + $0x110] sm:$0xff]
    %v268 = vld [vmem:[#allocation7 + $0x118] sm:$0xff]
    %v269 = vld [vmem:[#allocation7 + $0x120] sm:$0xff]
    %v270 = vld [vmem:[#allocation7 + $0x128] sm:$0xff]
    %v271 = vld [vmem:[#allocation7 + $0x130] sm:$0xff]
    %v272 = vld [vmem:[#allocation7 + $0x138] sm:$0xff]
    %v273 = vld [vmem:[#allocation7 + $0x140] sm:$0xff]
    %v274 = vld [vmem:[#allocation7 + $0x148] sm:$0xff]
    %v275 = vld [vmem:[#allocation7 + $0x150] sm:$0xff]
    %v276 = vld [vmem:[#allocation7 + $0x158] sm:$0xff]
    %v277 = vld [vmem:[#allocation7 + $0x160] sm:$0xff]
    %v278 = vld [vmem:[#allocation7 + $0x168] sm:$0xff]
    %v279 = vld [vmem:[#allocation7 + $0x170] sm:$0xff]
    %v280 = vld [vmem:[#allocation7 + $0x178] sm:$0xff]
    %v281 = vld [vmem:[#allocation7 + $0x180] sm:$0xff]
    %v282 = vld [vmem:[#allocation7 + $0x188] sm:$0xff]
    %v283 = vld [vmem:[#allocation7 + $0x190] sm:$0xff]
    %v284 = vld [vmem:[#allocation7 + $0x198] sm:$0xff]
    %v285 = vld [vmem:[#allocation7 + $0x1a0] sm:$0xff]
    %v286 = vld [vmem:[#allocation7 + $0x1a8] sm:$0xff]
    %v287 = vld [vmem:[#allocation7 + $0x1b0] sm:$0xff]
    %v288 = vld [vmem:[#allocation7 + $0x1b8] sm:$0xff]
    %v289 = vld [vmem:[#allocation7 + $0x1c0] sm:$0xff]
    %v290 = vld [vmem:[#allocation7 + $0x1c8] sm:$0xff]
    %v291 = vld [vmem:[#allocation7 + $0x1d0] sm:$0xff]
    %v292 = vld [vmem:[#allocation7 + $0x1d8] sm:$0xff]
    %v293 = vld [vmem:[#allocation7 + $0x1e0] sm:$0xff]
    %v294 = vld [vmem:[#allocation7 + $0x1e8] sm:$0xff]
    %v295 = vld [vmem:[#allocation7 + $0x1f0] sm:$0xff]
    %v296 = vld [vmem:[#allocation7 + $0x1f8] sm:$0xff]
    %v297 = vld [vmem:[%s4 + $0x2] sm:$0xf]
    %v299 = vlaneseq
    %v300 = vshrl.u32 %v299, 7
    %v301 = vsub.s32 0, %v300
    %v302 = vrot.slane %v297, %v301
    %v303 = vlaneseq
    %v304 = vshrl.u32 %v303, 7
    %v305 = vsub.s32 1, %v304
    %v306 = vrot.slane %v297, %v305
    %v307 = vlaneseq
    %v308 = vshrl.u32 %v307, 7
    %v309 = vsub.s32 2, %v308
    %v310 = vrot.slane %v297, %v309
    %v311 = vlaneseq
    %v312 = vshrl.u32 %v311, 7
    %v313 = vsub.s32 3, %v312
    %v314 = vrot.slane %v297, %v313
    %v383 = vunpack.c.l.b16 %v233
    %v384 = vunpack.c.h.b16 %v233
    %v385 = vunpack.c.l.b16 %v234
    %v386 = vunpack.c.h.b16 %v234
    %v387 = vunpack.c.l.b16 %v235
    %v388 = vunpack.c.h.b16 %v235
    %v389 = vunpack.c.l.b16 %v236
    %v390 = vunpack.c.h.b16 %v236
    %v391 = vunpack.c.l.b16 %v237
    %v392 = vunpack.c.h.b16 %v237
    %v393 = vunpack.c.l.b16 %v238
    %v394 = vunpack.c.h.b16 %v238
    %v395 = vunpack.c.l.b16 %v239
    %v396 = vunpack.c.h.b16 %v239
    %v397 = vunpack.c.l.b16 %v240
    %v398 = vunpack.c.h.b16 %v240
    %v399 = vunpack.c.l.b16 %v241
    %v400 = vunpack.c.h.b16 %v241
    %v401 = vunpack.c.l.b16 %v242
    %v402 = vunpack.c.h.b16 %v242
    %v403 = vunpack.c.l.b16 %v243
    %v404 = vunpack.c.h.b16 %v243
    %v405 = vunpack.c.l.b16 %v244
    %v406 = vunpack.c.h.b16 %v244
    %v407 = vunpack.c.l.b16 %v245
    %v408 = vunpack.c.h.b16 %v245
    %v409 = vunpack.c.l.b16 %v246
    %v410 = vunpack.c.h.b16 %v246
    %v411 = vunpack.c.l.b16 %v247
    %v412 = vunpack.c.h.b16 %v247
    %v413 = vunpack.c.l.b16 %v248
    %v414 = vunpack.c.h.b16 %v248
    %v415 = vunpack.c.l.b16 %v249
    %v416 = vunpack.c.h.b16 %v249
    %v417 = vunpack.c.l.b16 %v250
    %v418 = vunpack.c.h.b16 %v250
    %v419 = vunpack.c.l.b16 %v251
    %v420 = vunpack.c.h.b16 %v251
    %v421 = vunpack.c.l.b16 %v252
    %v422 = vunpack.c.h.b16 %v252
    %v423 = vunpack.c.l.b16 %v253
    %v424 = vunpack.c.h.b16 %v253
    %v425 = vunpack.c.l.b16 %v254
    %v426 = vunpack.c.h.b16 %v254
    %v427 = vunpack.c.l.b16 %v255
    %v428 = vunpack.c.h.b16 %v255
    %v429 = vunpack.c.l.b16 %v256
    %v430 = vunpack.c.h.b16 %v256
    %v431 = vunpack.c.l.b16 %v257
    %v432 = vunpack.c.h.b16 %v257
    %v433 = vunpack.c.l.b16 %v258
    %v434 = vunpack.c.h.b16 %v258
    %v435 = vunpack.c.l.b16 %v259
    %v436 = vunpack.c.h.b16 %v259
    %v437 = vunpack.c.l.b16 %v260
    %v438 = vunpack.c.h.b16 %v260
    %v439 = vunpack.c.l.b16 %v261
    %v440 = vunpack.c.h.b16 %v261
    %v441 = vunpack.c.l.b16 %v262
    %v442 = vunpack.c.h.b16 %v262
    %v443 = vunpack.c.l.b16 %v263
    %v444 = vunpack.c.h.b16 %v263
    %v445 = vunpack.c.l.b16 %v264
    %v446 = vunpack.c.h.b16 %v264
    %v447 = vunpack.c.l.b16 %v265
    %v448 = vunpack.c.h.b16 %v265
    %v449 = vunpack.c.l.b16 %v266
    %v450 = vunpack.c.h.b16 %v266
    %v451 = vunpack.c.l.b16 %v267
    %v452 = vunpack.c.h.b16 %v267
    %v453 = vunpack.c.l.b16 %v268
    %v454 = vunpack.c.h.b16 %v268
    %v455 = vunpack.c.l.b16 %v269
    %v456 = vunpack.c.h.b16 %v269
    %v457 = vunpack.c.l.b16 %v270
    %v458 = vunpack.c.h.b16 %v270
    %v459 = vunpack.c.l.b16 %v271
    %v460 = vunpack.c.h.b16 %v271
    %v461 = vunpack.c.l.b16 %v272
    %v462 = vunpack.c.h.b16 %v272
    %v463 = vunpack.c.l.b16 %v273
    %v464 = vunpack.c.h.b16 %v273
    %v465 = vunpack.c.l.b16 %v274
    %v466 = vunpack.c.h.b16 %v274
    %v467 = vunpack.c.l.b16 %v275
    %v468 = vunpack.c.h.b16 %v275
    %v469 = vunpack.c.l.b16 %v276
    %v470 = vunpack.c.h.b16 %v276
    %v471 = vunpack.c.l.b16 %v277
    %v472 = vunpack.c.h.b16 %v277
    %v473 = vunpack.c.l.b16 %v278
    %v474 = vunpack.c.h.b16 %v278
    %v475 = vunpack.c.l.b16 %v279
    %v476 = vunpack.c.h.b16 %v279
    %v477 = vunpack.c.l.b16 %v280
    %v478 = vunpack.c.h.b16 %v280
    %v479 = vunpack.c.l.b16 %v281
    %v480 = vunpack.c.h.b16 %v281
    %v481 = vunpack.c.l.b16 %v282
    %v482 = vunpack.c.h.b16 %v282
    %v483 = vunpack.c.l.b16 %v283
    %v484 = vunpack.c.h.b16 %v283
    %v485 = vunpack.c.l.b16 %v284
    %v486 = vunpack.c.h.b16 %v284
    %v487 = vunpack.c.l.b16 %v285
    %v488 = vunpack.c.h.b16 %v285
    %v489 = vunpack.c.l.b16 %v286
    %v490 = vunpack.c.h.b16 %v286
    %v491 = vunpack.c.l.b16 %v287
    %v492 = vunpack.c.h.b16 %v287
    %v493 = vunpack.c.l.b16 %v288
    %v494 = vunpack.c.h.b16 %v288
    %v495 = vunpack.c.l.b16 %v289
    %v496 = vunpack.c.h.b16 %v289
    %v497 = vunpack.c.l.b16 %v290
    %v498 = vunpack.c.h.b16 %v290
    %v499 = vunpack.c.l.b16 %v291
    %v500 = vunpack.c.h.b16 %v291
    %v501 = vunpack.c.l.b16 %v292
    %v502 = vunpack.c.h.b16 %v292
    %v503 = vunpack.c.l.b16 %v293
    %v504 = vunpack.c.h.b16 %v293
    %v505 = vunpack.c.l.b16 %v294
    %v506 = vunpack.c.h.b16 %v294
    %v507 = vunpack.c.l.b16 %v295
    %v508 = vunpack.c.h.b16 %v295
    %v509 = vunpack.c.l.b16 %v296
    %v510 = vunpack.c.h.b16 %v296
    %v511 = vpack.c.b16 %v387, %v383
    %v512 = vpack.c.b16 %v388, %v384
    %v513 = vpack.c.b16 %v389, %v385
    %v514 = vpack.c.b16 %v390, %v386
    %v515 = vpack.c.b16 %v395, %v391
    %v516 = vpack.c.b16 %v396, %v392
    %v517 = vpack.c.b16 %v397, %v393
    %v518 = vpack.c.b16 %v398, %v394
    %v519 = vpack.c.b16 %v403, %v399
    %v520 = vpack.c.b16 %v404, %v400
    %v521 = vpack.c.b16 %v405, %v401
    %v522 = vpack.c.b16 %v406, %v402
    %v523 = vpack.c.b16 %v411, %v407
    %v524 = vpack.c.b16 %v412, %v408
    %v525 = vpack.c.b16 %v413, %v409
    %v526 = vpack.c.b16 %v414, %v410
    %v527 = vpack.c.b16 %v419, %v415
    %v528 = vpack.c.b16 %v420, %v416
    %v529 = vpack.c.b16 %v421, %v417
    %v530 = vpack.c.b16 %v422, %v418
    %v531 = vpack.c.b16 %v427, %v423
    %v532 = vpack.c.b16 %v428, %v424
    %v533 = vpack.c.b16 %v429, %v425
    %v534 = vpack.c.b16 %v430, %v426
    %v535 = vpack.c.b16 %v435, %v431
    %v536 = vpack.c.b16 %v436, %v432
    %v537 = vpack.c.b16 %v437, %v433
    %v538 = vpack.c.b16 %v438, %v434
    %v539 = vpack.c.b16 %v443, %v439
    %v540 = vpack.c.b16 %v444, %v440
    %v541 = vpack.c.b16 %v445, %v441
    %v542 = vpack.c.b16 %v446, %v442
    %v543 = vpack.c.b16 %v451, %v447
    %v544 = vpack.c.b16 %v452, %v448
    %v545 = vpack.c.b16 %v453, %v449
    %v546 = vpack.c.b16 %v454, %v450
    %v547 = vpack.c.b16 %v459, %v455
    %v548 = vpack.c.b16 %v460, %v456
    %v549 = vpack.c.b16 %v461, %v457
    %v550 = vpack.c.b16 %v462, %v458
    %v551 = vpack.c.b16 %v467, %v463
    %v552 = vpack.c.b16 %v468, %v464
    %v553 = vpack.c.b16 %v469, %v465
    %v554 = vpack.c.b16 %v470, %v466
    %v555 = vpack.c.b16 %v475, %v471
    %v556 = vpack.c.b16 %v476, %v472
    %v557 = vpack.c.b16 %v477, %v473
    %v558 = vpack.c.b16 %v478, %v474
    %v559 = vpack.c.b16 %v483, %v479
    %v560 = vpack.c.b16 %v484, %v480
    %v561 = vpack.c.b16 %v485, %v481
    %v562 = vpack.c.b16 %v486, %v482
    %v563 = vpack.c.b16 %v491, %v487
    %v564 = vpack.c.b16 %v492, %v488
    %v565 = vpack.c.b16 %v493, %v489
    %v566 = vpack.c.b16 %v494, %v490
    %v567 = vpack.c.b16 %v499, %v495
    %v568 = vpack.c.b16 %v500, %v496
    %v569 = vpack.c.b16 %v501, %v497
    %v570 = vpack.c.b16 %v502, %v498
    %v571 = vpack.c.b16 %v507, %v503
    %v572 = vpack.c.b16 %v508, %v504
    %v573 = vpack.c.b16 %v509, %v505
    %v574 = vpack.c.b16 %v510, %v506
    %639 = vmatprep.subr.bf16.mxu0 %v512
    %640 = vmatpush1.bf16.msra.mxu0 %v511
    %641 = vmatprep.subr.bf16.mxu0 %v516
    %642 = vmatpush1.bf16.msra.mxu0 %v515
    %643 = vmatprep.subr.bf16.mxu0 %v520
    %644 = vmatpush1.bf16.msra.mxu0 %v519
    %645 = vmatprep.subr.bf16.mxu0 %v524
    %646 = vmatpush1.bf16.msra.mxu0 %v523
    %647 = vmatprep.subr.bf16.mxu0 %v528
    %648 = vmatpush1.bf16.msra.mxu0 %v527
    %649 = vmatprep.subr.bf16.mxu0 %v532
    %650 = vmatpush1.bf16.msra.mxu0 %v531
    %651 = vmatprep.subr.bf16.mxu0 %v536
    %652 = vmatpush1.bf16.msra.mxu0 %v535
    %653 = vmatprep.subr.bf16.mxu0 %v540
    %654 = vmatpush1.bf16.msra.mxu0 %v539
    %655 = vmatprep.subr.bf16.mxu0 %v544
    %656 = vmatpush1.bf16.msra.mxu0 %v543
    %657 = vmatprep.subr.bf16.mxu0 %v548
    %658 = vmatpush1.bf16.msra.mxu0 %v547
    %659 = vmatprep.subr.bf16.mxu0 %v552
    %660 = vmatpush1.bf16.msra.mxu0 %v551
    %661 = vmatprep.subr.bf16.mxu0 %v556
    %662 = vmatpush1.bf16.msra.mxu0 %v555
    %663 = vmatprep.subr.bf16.mxu0 %v560
    %664 = vmatpush1.bf16.msra.mxu0 %v559
    %665 = vmatprep.subr.bf16.mxu0 %v564
    %666 = vmatpush1.bf16.msra.mxu0 %v563
    %667 = vmatprep.subr.bf16.mxu0 %v568
    %668 = vmatpush1.bf16.msra.mxu0 %v567
    %669 = vmatprep.subr.bf16.mxu0 %v572
    %670 = vmatpush1.bf16.msra.mxu0 %v571
    %671 = vmatprep.mubr.bf16.mxu0 %v232
    %672 = vmatmul.mubr.bf16.gmra.mrb[0].mxu0 %v231
    %v673 = vpop.f32.mrb[0].mxu0
    %v674 = vadd.f32 %v302, %v673
    %v675 = vpop.f32.mrb[0].mxu0
    %v676 = vadd.f32 %v306, %v675
    %v677 = vpop.f32.mrb[0].mxu0
    %v678 = vpop.f32.mrb[0].mxu0
    %679 = vdwg.mxu0
    %680 = vmatprep.subr.bf16.mxu0 %v514
    %681 = vmatpush1.bf16.msra.mxu0 %v513
    %682 = vmatprep.subr.bf16.mxu0 %v518
    %683 = vmatpush1.bf16.msra.mxu0 %v517
    %684 = vmatprep.subr.bf16.mxu0 %v522
    %685 = vmatpush1.bf16.msra.mxu0 %v521
    %686 = vmatprep.subr.bf16.mxu0 %v526
    %687 = vmatpush1.bf16.msra.mxu0 %v525
    %688 = vmatprep.subr.bf16.mxu0 %v530
    %689 = vmatpush1.bf16.msra.mxu0 %v529
    %690 = vmatprep.subr.bf16.mxu0 %v534
    %691 = vmatpush1.bf16.msra.mxu0 %v533
    %692 = vmatprep.subr.bf16.mxu0 %v538
    %693 = vmatpush1.bf16.msra.mxu0 %v537
    %694 = vmatprep.subr.bf16.mxu0 %v542
    %695 = vmatpush1.bf16.msra.mxu0 %v541
    %696 = vmatprep.subr.bf16.mxu0 %v546
    %697 = vmatpush1.bf16.msra.mxu0 %v545
    %698 = vmatprep.subr.bf16.mxu0 %v550
    %699 = vmatpush1.bf16.msra.mxu0 %v549
    %700 = vmatprep.subr.bf16.mxu0 %v554
    %701 = vmatpush1.bf16.msra.mxu0 %v553
    %702 = vmatprep.subr.bf16.mxu0 %v558
    %703 = vmatpush1.bf16.msra.mxu0 %v557
    %704 = vmatprep.subr.bf16.mxu0 %v562
    %705 = vmatpush1.bf16.msra.mxu0 %v561
    %706 = vmatprep.subr.bf16.mxu0 %v566
    %707 = vmatpush1.bf16.msra.mxu0 %v565
    %708 = vmatprep.subr.bf16.mxu0 %v570
    %709 = vmatpush1.bf16.msra.mxu0 %v569
    %710 = vmatprep.subr.bf16.mxu0 %v574
    %711 = vmatpush1.bf16.msra.mxu0 %v573
    %712 = vmatprep.mubr.bf16.mxu0 %v232
    %713 = vmatmul.mubr.bf16.gmra.mrb[0].mxu0 %v231
    %v714 = vpop.f32.mrb[0].mxu0
    %v715 = vadd.f32 %v310, %v714
    %v716 = vpop.f32.mrb[0].mxu0
    %v717 = vadd.f32 %v314, %v716
    %v718 = vpop.f32.mrb[0].mxu0
    %v719 = vpop.f32.mrb[0].mxu0
    %720 = vdwg.mxu0
    %vm721 = vcmp.gt.f32.partialorder %v674, 0.0
    %vm722 = vcmp.gt.f32.partialorder %v676, 0.0
    %vm723 = vcmp.gt.f32.partialorder %v715, 0.0
    %vm724 = vcmp.gt.f32.partialorder %v717, 0.0
    %v725 = vmul.f32 %v674, 0.01
    %v726 = vmul.f32 %v676, 0.01
    %v727 = vmul.f32 %v715, 0.01
    %v728 = vmul.f32 %v717, 0.01
    %v729 = vsel %vm721, %v674, %v725
    %v730 = vsel %vm722, %v676, %v726
    %v731 = vsel %vm723, %v715, %v727
    %v732 = vsel %vm724, %v717, %v728
    %v733 = vpack.c.bf16 %v729, %v729
    %v734 = vpack.c.bf16 %v730, %v730
    %v735 = vpack.c.bf16 %v731, %v731
    %v736 = vpack.c.bf16 %v732, %v732
    %v737 = vld [vmem:[#allocation8] sm:$0xff]
    %v738 = vld [vmem:[#allocation8 + $0x8] sm:$0xff]
    %v739 = vld [vmem:[#allocation8 + $0x10] sm:$0xff]
    %v740 = vld [vmem:[#allocation8 + $0x18] sm:$0xff]
    %v741 = vld [vmem:[#allocation8 + $0x20] sm:$0xff]
    %v742 = vld [vmem:[#allocation8 + $0x28] sm:$0xff]
    %v743 = vld [vmem:[#allocation8 + $0x30] sm:$0xff]
    %v744 = vld [vmem:[#allocation8 + $0x38] sm:$0xff]
    %v745 = vld [vmem:[#allocation8 + $0x40] sm:$0xff]
    %v746 = vld [vmem:[#allocation8 + $0x48] sm:$0xff]
    %v747 = vld [vmem:[#allocation8 + $0x50] sm:$0xff]
    %v748 = vld [vmem:[#allocation8 + $0x58] sm:$0xff]
    %v749 = vld [vmem:[#allocation8 + $0x60] sm:$0xff]
    %v750 = vld [vmem:[#allocation8 + $0x68] sm:$0xff]
    %v751 = vld [vmem:[#allocation8 + $0x70] sm:$0xff]
    %v752 = vld [vmem:[#allocation8 + $0x78] sm:$0xff]
    %v753 = vld [vmem:[#allocation8 + $0x80] sm:$0xff]
    %v754 = vld [vmem:[#allocation8 + $0x88] sm:$0xff]
    %v755 = vld [vmem:[#allocation8 + $0x90] sm:$0xff]
    %v756 = vld [vmem:[#allocation8 + $0x98] sm:$0xff]
    %v757 = vld [vmem:[#allocation8 + $0xa0] sm:$0xff]
    %v758 = vld [vmem:[#allocation8 + $0xa8] sm:$0xff]
    %v759 = vld [vmem:[#allocation8 + $0xb0] sm:$0xff]
    %v760 = vld [vmem:[#allocation8 + $0xb8] sm:$0xff]
    %v761 = vld [vmem:[#allocation8 + $0xc0] sm:$0xff]
    %v762 = vld [vmem:[#allocation8 + $0xc8] sm:$0xff]
    %v763 = vld [vmem:[#allocation8 + $0xd0] sm:$0xff]
    %v764 = vld [vmem:[#allocation8 + $0xd8] sm:$0xff]
    %v765 = vld [vmem:[#allocation8 + $0xe0] sm:$0xff]
    %v766 = vld [vmem:[#allocation8 + $0xe8] sm:$0xff]
    %v767 = vld [vmem:[#allocation8 + $0xf0] sm:$0xff]
    %v768 = vld [vmem:[#allocation8 + $0xf8] sm:$0xff]
    %v769 = vld [vmem:[#allocation8 + $0x100] sm:$0xff]
    %v770 = vld [vmem:[#allocation8 + $0x108] sm:$0xff]
    %v771 = vld [vmem:[#allocation8 + $0x110] sm:$0xff]
    %v772 = vld [vmem:[#allocation8 + $0x118] sm:$0xff]
    %v773 = vld [vmem:[#allocation8 + $0x120] sm:$0xff]
    %v774 = vld [vmem:[#allocation8 + $0x128] sm:$0xff]
    %v775 = vld [vmem:[#allocation8 + $0x130] sm:$0xff]
    %v776 = vld [vmem:[#allocation8 + $0x138] sm:$0xff]
    %v777 = vld [vmem:[#allocation8 + $0x140] sm:$0xff]
    %v778 = vld [vmem:[#allocation8 + $0x148] sm:$0xff]
    %v779 = vld [vmem:[#allocation8 + $0x150] sm:$0xff]
    %v780 = vld [vmem:[#allocation8 + $0x158] sm:$0xff]
    %v781 = vld [vmem:[#allocation8 + $0x160] sm:$0xff]
    %v782 = vld [vmem:[#allocation8 + $0x168] sm:$0xff]
    %v783 = vld [vmem:[#allocation8 + $0x170] sm:$0xff]
    %v784 = vld [vmem:[#allocation8 + $0x178] sm:$0xff]
    %v785 = vld [vmem:[#allocation8 + $0x180] sm:$0xff]
    %v786 = vld [vmem:[#allocation8 + $0x188] sm:$0xff]
    %v787 = vld [vmem:[#allocation8 + $0x190] sm:$0xff]
    %v788 = vld [vmem:[#allocation8 + $0x198] sm:$0xff]
    %v789 = vld [vmem:[#allocation8 + $0x1a0] sm:$0xff]
    %v790 = vld [vmem:[#allocation8 + $0x1a8] sm:$0xff]
    %v791 = vld [vmem:[#allocation8 + $0x1b0] sm:$0xff]
    %v792 = vld [vmem:[#allocation8 + $0x1b8] sm:$0xff]
    %v793 = vld [vmem:[#allocation8 + $0x1c0] sm:$0xff]
    %v794 = vld [vmem:[#allocation8 + $0x1c8] sm:$0xff]
    %v795 = vld [vmem:[#allocation8 + $0x1d0] sm:$0xff]
    %v796 = vld [vmem:[#allocation8 + $0x1d8] sm:$0xff]
    %v797 = vld [vmem:[#allocation8 + $0x1e0] sm:$0xff]
    %v798 = vld [vmem:[#allocation8 + $0x1e8] sm:$0xff]
    %v799 = vld [vmem:[#allocation8 + $0x1f0] sm:$0xff]
    %v800 = vld [vmem:[#allocation8 + $0x1f8] sm:$0xff]
    %v801 = vld [vmem:[#allocation8 + $0x200] sm:$0xff]
    %v802 = vld [vmem:[#allocation8 + $0x208] sm:$0xff]
    %v803 = vld [vmem:[#allocation8 + $0x210] sm:$0xff]
    %v804 = vld [vmem:[#allocation8 + $0x218] sm:$0xff]
    %v805 = vld [vmem:[#allocation8 + $0x220] sm:$0xff]
    %v806 = vld [vmem:[#allocation8 + $0x228] sm:$0xff]
    %v807 = vld [vmem:[#allocation8 + $0x230] sm:$0xff]
    %v808 = vld [vmem:[#allocation8 + $0x238] sm:$0xff]
    %v809 = vld [vmem:[#allocation8 + $0x240] sm:$0xff]
    %v810 = vld [vmem:[#allocation8 + $0x248] sm:$0xff]
    %v811 = vld [vmem:[#allocation8 + $0x250] sm:$0xff]
    %v812 = vld [vmem:[#allocation8 + $0x258] sm:$0xff]
    %v813 = vld [vmem:[#allocation8 + $0x260] sm:$0xff]
    %v814 = vld [vmem:[#allocation8 + $0x268] sm:$0xff]
    %v815 = vld [vmem:[#allocation8 + $0x270] sm:$0xff]
    %v816 = vld [vmem:[#allocation8 + $0x278] sm:$0xff]
    %v817 = vld [vmem:[#allocation8 + $0x280] sm:$0xff]
    %v818 = vld [vmem:[#allocation8 + $0x288] sm:$0xff]
    %v819 = vld [vmem:[#allocation8 + $0x290] sm:$0xff]
    %v820 = vld [vmem:[#allocation8 + $0x298] sm:$0xff]
    %v821 = vld [vmem:[#allocation8 + $0x2a0] sm:$0xff]
    %v822 = vld [vmem:[#allocation8 + $0x2a8] sm:$0xff]
    %v823 = vld [vmem:[#allocation8 + $0x2b0] sm:$0xff]
    %v824 = vld [vmem:[#allocation8 + $0x2b8] sm:$0xff]
    %v825 = vld [vmem:[#allocation8 + $0x2c0] sm:$0xff]
    %v826 = vld [vmem:[#allocation8 + $0x2c8] sm:$0xff]
    %v827 = vld [vmem:[#allocation8 + $0x2d0] sm:$0xff]
    %v828 = vld [vmem:[#allocation8 + $0x2d8] sm:$0xff]
    %v829 = vld [vmem:[#allocation8 + $0x2e0] sm:$0xff]
    %v830 = vld [vmem:[#allocation8 + $0x2e8] sm:$0xff]
    %v831 = vld [vmem:[#allocation8 + $0x2f0] sm:$0xff]
    %v832 = vld [vmem:[#allocation8 + $0x2f8] sm:$0xff]
    %v833 = vld [vmem:[#allocation8 + $0x300] sm:$0xff]
    %v834 = vld [vmem:[#allocation8 + $0x308] sm:$0xff]
    %v835 = vld [vmem:[#allocation8 + $0x310] sm:$0xff]
    %v836 = vld [vmem:[#allocation8 + $0x318] sm:$0xff]
    %v837 = vld [vmem:[#allocation8 + $0x320] sm:$0xff]
    %v838 = vld [vmem:[#allocation8 + $0x328] sm:$0xff]
    %v839 = vld [vmem:[#allocation8 + $0x330] sm:$0xff]
    %v840 = vld [vmem:[#allocation8 + $0x338] sm:$0xff]
    %v841 = vld [vmem:[#allocation8 + $0x340] sm:$0xff]
    %v842 = vld [vmem:[#allocation8 + $0x348] sm:$0xff]
    %v843 = vld [vmem:[#allocation8 + $0x350] sm:$0xff]
    %v844 = vld [vmem:[#allocation8 + $0x358] sm:$0xff]
    %v845 = vld [vmem:[#allocation8 + $0x360] sm:$0xff]
    %v846 = vld [vmem:[#allocation8 + $0x368] sm:$0xff]
    %v847 = vld [vmem:[#allocation8 + $0x370] sm:$0xff]
    %v848 = vld [vmem:[#allocation8 + $0x378] sm:$0xff]
    %v849 = vld [vmem:[#allocation8 + $0x380] sm:$0xff]
    %v850 = vld [vmem:[#allocation8 + $0x388] sm:$0xff]
    %v851 = vld [vmem:[#allocation8 + $0x390] sm:$0xff]
    %v852 = vld [vmem:[#allocation8 + $0x398] sm:$0xff]
    %v853 = vld [vmem:[#allocation8 + $0x3a0] sm:$0xff]
    %v854 = vld [vmem:[#allocation8 + $0x3a8] sm:$0xff]
    %v855 = vld [vmem:[#allocation8 + $0x3b0] sm:$0xff]
    %v856 = vld [vmem:[#allocation8 + $0x3b8] sm:$0xff]
    %v857 = vld [vmem:[#allocation8 + $0x3c0] sm:$0xff]
    %v858 = vld [vmem:[#allocation8 + $0x3c8] sm:$0xff]
    %v859 = vld [vmem:[#allocation8 + $0x3d0] sm:$0xff]
    %v860 = vld [vmem:[#allocation8 + $0x3d8] sm:$0xff]
    %v861 = vld [vmem:[#allocation8 + $0x3e0] sm:$0xff]
    %v862 = vld [vmem:[#allocation8 + $0x3e8] sm:$0xff]
    %v863 = vld [vmem:[#allocation8 + $0x3f0] sm:$0xff]
    %v864 = vld [vmem:[#allocation8 + $0x3f8] sm:$0xff]
    %v865 = vld [vmem:[#allocation8 + $0x400] sm:$0xff]
    %v866 = vld [vmem:[#allocation8 + $0x408] sm:$0xff]
    %v867 = vld [vmem:[#allocation8 + $0x410] sm:$0xff]
    %v868 = vld [vmem:[#allocation8 + $0x418] sm:$0xff]
    %v869 = vld [vmem:[#allocation8 + $0x420] sm:$0xff]
    %v870 = vld [vmem:[#allocation8 + $0x428] sm:$0xff]
    %v871 = vld [vmem:[#allocation8 + $0x430] sm:$0xff]
    %v872 = vld [vmem:[#allocation8 + $0x438] sm:$0xff]
    %v873 = vld [vmem:[#allocation8 + $0x440] sm:$0xff]
    %v874 = vld [vmem:[#allocation8 + $0x448] sm:$0xff]
    %v875 = vld [vmem:[#allocation8 + $0x450] sm:$0xff]
    %v876 = vld [vmem:[#allocation8 + $0x458] sm:$0xff]
    %v877 = vld [vmem:[#allocation8 + $0x460] sm:$0xff]
    %v878 = vld [vmem:[#allocation8 + $0x468] sm:$0xff]
    %v879 = vld [vmem:[#allocation8 + $0x470] sm:$0xff]
    %v880 = vld [vmem:[#allocation8 + $0x478] sm:$0xff]
    %v881 = vld [vmem:[#allocation8 + $0x480] sm:$0xff]
    %v882 = vld [vmem:[#allocation8 + $0x488] sm:$0xff]
    %v883 = vld [vmem:[#allocation8 + $0x490] sm:$0xff]
    %v884 = vld [vmem:[#allocation8 + $0x498] sm:$0xff]
    %v885 = vld [vmem:[#allocation8 + $0x4a0] sm:$0xff]
    %v886 = vld [vmem:[#allocation8 + $0x4a8] sm:$0xff]
    %v887 = vld [vmem:[#allocation8 + $0x4b0] sm:$0xff]
    %v888 = vld [vmem:[#allocation8 + $0x4b8] sm:$0xff]
    %v889 = vld [vmem:[#allocation8 + $0x4c0] sm:$0xff]
    %v890 = vld [vmem:[#allocation8 + $0x4c8] sm:$0xff]
    %v891 = vld [vmem:[#allocation8 + $0x4d0] sm:$0xff]
    %v892 = vld [vmem:[#allocation8 + $0x4d8] sm:$0xff]
    %v893 = vld [vmem:[#allocation8 + $0x4e0] sm:$0xff]
    %v894 = vld [vmem:[#allocation8 + $0x4e8] sm:$0xff]
    %v895 = vld [vmem:[#allocation8 + $0x4f0] sm:$0xff]
    %v896 = vld [vmem:[#allocation8 + $0x4f8] sm:$0xff]
    %v897 = vld [vmem:[#allocation8 + $0x500] sm:$0xff]
    %v898 = vld [vmem:[#allocation8 + $0x508] sm:$0xff]
    %v899 = vld [vmem:[#allocation8 + $0x510] sm:$0xff]
    %v900 = vld [vmem:[#allocation8 + $0x518] sm:$0xff]
    %v901 = vld [vmem:[#allocation8 + $0x520] sm:$0xff]
    %v902 = vld [vmem:[#allocation8 + $0x528] sm:$0xff]
    %v903 = vld [vmem:[#allocation8 + $0x530] sm:$0xff]
    %v904 = vld [vmem:[#allocation8 + $0x538] sm:$0xff]
    %v905 = vld [vmem:[#allocation8 + $0x540] sm:$0xff]
    %v906 = vld [vmem:[#allocation8 + $0x548] sm:$0xff]
    %v907 = vld [vmem:[#allocation8 + $0x550] sm:$0xff]
    %v908 = vld [vmem:[#allocation8 + $0x558] sm:$0xff]
    %v909 = vld [vmem:[#allocation8 + $0x560] sm:$0xff]
    %v910 = vld [vmem:[#allocation8 + $0x568] sm:$0xff]
    %v911 = vld [vmem:[#allocation8 + $0x570] sm:$0xff]
    %v912 = vld [vmem:[#allocation8 + $0x578] sm:$0xff]
    %v913 = vld [vmem:[#allocation8 + $0x580] sm:$0xff]
    %v914 = vld [vmem:[#allocation8 + $0x588] sm:$0xff]
    %v915 = vld [vmem:[#allocation8 + $0x590] sm:$0xff]
    %v916 = vld [vmem:[#allocation8 + $0x598] sm:$0xff]
    %v917 = vld [vmem:[#allocation8 + $0x5a0] sm:$0xff]
    %v918 = vld [vmem:[#allocation8 + $0x5a8] sm:$0xff]
    %v919 = vld [vmem:[#allocation8 + $0x5b0] sm:$0xff]
    %v920 = vld [vmem:[#allocation8 + $0x5b8] sm:$0xff]
    %v921 = vld [vmem:[#allocation8 + $0x5c0] sm:$0xff]
    %v922 = vld [vmem:[#allocation8 + $0x5c8] sm:$0xff]
    %v923 = vld [vmem:[#allocation8 + $0x5d0] sm:$0xff]
    %v924 = vld [vmem:[#allocation8 + $0x5d8] sm:$0xff]
    %v925 = vld [vmem:[#allocation8 + $0x5e0] sm:$0xff]
    %v926 = vld [vmem:[#allocation8 + $0x5e8] sm:$0xff]
    %v927 = vld [vmem:[#allocation8 + $0x5f0] sm:$0xff]
    %v928 = vld [vmem:[#allocation8 + $0x5f8] sm:$0xff]
    %v929 = vld [vmem:[#allocation8 + $0x600] sm:$0xff]
    %v930 = vld [vmem:[#allocation8 + $0x608] sm:$0xff]
    %v931 = vld [vmem:[#allocation8 + $0x610] sm:$0xff]
    %v932 = vld [vmem:[#allocation8 + $0x618] sm:$0xff]
    %v933 = vld [vmem:[#allocation8 + $0x620] sm:$0xff]
    %v934 = vld [vmem:[#allocation8 + $0x628] sm:$0xff]
    %v935 = vld [vmem:[#allocation8 + $0x630] sm:$0xff]
    %v936 = vld [vmem:[#allocation8 + $0x638] sm:$0xff]
    %v937 = vld [vmem:[#allocation8 + $0x640] sm:$0xff]
    %v938 = vld [vmem:[#allocation8 + $0x648] sm:$0xff]
    %v939 = vld [vmem:[#allocation8 + $0x650] sm:$0xff]
    %v940 = vld [vmem:[#allocation8 + $0x658] sm:$0xff]
    %v941 = vld [vmem:[#allocation8 + $0x660] sm:$0xff]
    %v942 = vld [vmem:[#allocation8 + $0x668] sm:$0xff]
    %v943 = vld [vmem:[#allocation8 + $0x670] sm:$0xff]
    %v944 = vld [vmem:[#allocation8 + $0x678] sm:$0xff]
    %v945 = vld [vmem:[#allocation8 + $0x680] sm:$0xff]
    %v946 = vld [vmem:[#allocation8 + $0x688] sm:$0xff]
    %v947 = vld [vmem:[#allocation8 + $0x690] sm:$0xff]
    %v948 = vld [vmem:[#allocation8 + $0x698] sm:$0xff]
    %v949 = vld [vmem:[#allocation8 + $0x6a0] sm:$0xff]
    %v950 = vld [vmem:[#allocation8 + $0x6a8] sm:$0xff]
    %v951 = vld [vmem:[#allocation8 + $0x6b0] sm:$0xff]
    %v952 = vld [vmem:[#allocation8 + $0x6b8] sm:$0xff]
    %v953 = vld [vmem:[#allocation8 + $0x6c0] sm:$0xff]
    %v954 = vld [vmem:[#allocation8 + $0x6c8] sm:$0xff]
    %v955 = vld [vmem:[#allocation8 + $0x6d0] sm:$0xff]
    %v956 = vld [vmem:[#allocation8 + $0x6d8] sm:$0xff]
    %v957 = vld [vmem:[#allocation8 + $0x6e0] sm:$0xff]
    %v958 = vld [vmem:[#allocation8 + $0x6e8] sm:$0xff]
    %v959 = vld [vmem:[#allocation8 + $0x6f0] sm:$0xff]
    %v960 = vld [vmem:[#allocation8 + $0x6f8] sm:$0xff]
    %v961 = vld [vmem:[#allocation8 + $0x700] sm:$0xff]
    %v962 = vld [vmem:[#allocation8 + $0x708] sm:$0xff]
    %v963 = vld [vmem:[#allocation8 + $0x710] sm:$0xff]
    %v964 = vld [vmem:[#allocation8 + $0x718] sm:$0xff]
    %v965 = vld [vmem:[#allocation8 + $0x720] sm:$0xff]
    %v966 = vld [vmem:[#allocation8 + $0x728] sm:$0xff]
    %v967 = vld [vmem:[#allocation8 + $0x730] sm:$0xff]
    %v968 = vld [vmem:[#allocation8 + $0x738] sm:$0xff]
    %v969 = vld [vmem:[#allocation8 + $0x740] sm:$0xff]
    %v970 = vld [vmem:[#allocation8 + $0x748] sm:$0xff]
    %v971 = vld [vmem:[#allocation8 + $0x750] sm:$0xff]
    %v972 = vld [vmem:[#allocation8 + $0x758] sm:$0xff]
    %v973 = vld [vmem:[#allocation8 + $0x760] sm:$0xff]
    %v974 = vld [vmem:[#allocation8 + $0x768] sm:$0xff]
    %v975 = vld [vmem:[#allocation8 + $0x770] sm:$0xff]
    %v976 = vld [vmem:[#allocation8 + $0x778] sm:$0xff]
    %v977 = vld [vmem:[#allocation8 + $0x780] sm:$0xff]
    %v978 = vld [vmem:[#allocation8 + $0x788] sm:$0xff]
    %v979 = vld [vmem:[#allocation8 + $0x790] sm:$0xff]
    %v980 = vld [vmem:[#allocation8 + $0x798] sm:$0xff]
    %v981 = vld [vmem:[#allocation8 + $0x7a0] sm:$0xff]
    %v982 = vld [vmem:[#allocation8 + $0x7a8] sm:$0xff]
    %v983 = vld [vmem:[#allocation8 + $0x7b0] sm:$0xff]
    %v984 = vld [vmem:[#allocation8 + $0x7b8] sm:$0xff]
    %v985 = vld [vmem:[#allocation8 + $0x7c0] sm:$0xff]
    %v986 = vld [vmem:[#allocation8 + $0x7c8] sm:$0xff]
    %v987 = vld [vmem:[#allocation8 + $0x7d0] sm:$0xff]
    %v988 = vld [vmem:[#allocation8 + $0x7d8] sm:$0xff]
    %v989 = vld [vmem:[#allocation8 + $0x7e0] sm:$0xff]
    %v990 = vld [vmem:[#allocation8 + $0x7e8] sm:$0xff]
    %v991 = vld [vmem:[#allocation8 + $0x7f0] sm:$0xff]
    %v992 = vld [vmem:[#allocation8 + $0x7f8] sm:$0xff]
    %v993 = vld [vmem:[%s4 + $0x6] sm:$0xff]
    %v995 = vlaneseq
    %v996 = vshrl.u32 %v995, 7
    %v997 = vsub.s32 0, %v996
    %v998 = vrot.slane %v993, %v997
    %v999 = vlaneseq
    %v1000 = vshrl.u32 %v999, 7
    %v1001 = vsub.s32 1, %v1000
    %v1002 = vrot.slane %v993, %v1001
    %v1003 = vlaneseq
    %v1004 = vshrl.u32 %v1003, 7
    %v1005 = vsub.s32 2, %v1004
    %v1006 = vrot.slane %v993, %v1005
    %v1007 = vlaneseq
    %v1008 = vshrl.u32 %v1007, 7
    %v1009 = vsub.s32 3, %v1008
    %v1010 = vrot.slane %v993, %v1009
    %v1011 = vlaneseq
    %v1012 = vshrl.u32 %v1011, 7
    %v1013 = vsub.s32 4, %v1012
    %v1014 = vrot.slane %v993, %v1013
    %v1015 = vlaneseq
    %v1016 = vshrl.u32 %v1015, 7
    %v1017 = vsub.s32 5, %v1016
    %v1018 = vrot.slane %v993, %v1017
    %v1019 = vlaneseq
    %v1020 = vshrl.u32 %v1019, 7
    %v1021 = vsub.s32 6, %v1020
    %v1022 = vrot.slane %v993, %v1021
    %v1023 = vlaneseq
    %v1024 = vshrl.u32 %v1023, 7
    %v1025 = vsub.s32 7, %v1024
    %v1026 = vrot.slane %v993, %v1025
    %v1291 = vunpack.c.l.b16 %v737
    %v1292 = vunpack.c.h.b16 %v737
    %v1293 = vunpack.c.l.b16 %v738
    %v1294 = vunpack.c.h.b16 %v738
    %v1295 = vunpack.c.l.b16 %v739
    %v1296 = vunpack.c.h.b16 %v739
    %v1297 = vunpack.c.l.b16 %v740
    %v1298 = vunpack.c.h.b16 %v740
    %v1299 = vunpack.c.l.b16 %v741
    %v1300 = vunpack.c.h.b16 %v741
    %v1301 = vunpack.c.l.b16 %v742
    %v1302 = vunpack.c.h.b16 %v742
    %v1303 = vunpack.c.l.b16 %v743
    %v1304 = vunpack.c.h.b16 %v743
    %v1305 = vunpack.c.l.b16 %v744
    %v1306 = vunpack.c.h.b16 %v744
    %v1307 = vunpack.c.l.b16 %v745
    %v1308 = vunpack.c.h.b16 %v745
    %v1309 = vunpack.c.l.b16 %v746
    %v1310 = vunpack.c.h.b16 %v746
    %v1311 = vunpack.c.l.b16 %v747
    %v1312 = vunpack.c.h.b16 %v747
    %v1313 = vunpack.c.l.b16 %v748
    %v1314 = vunpack.c.h.b16 %v748
    %v1315 = vunpack.c.l.b16 %v749
    %v1316 = vunpack.c.h.b16 %v749
    %v1317 = vunpack.c.l.b16 %v750
    %v1318 = vunpack.c.h.b16 %v750
    %v1319 = vunpack.c.l.b16 %v751
    %v1320 = vunpack.c.h.b16 %v751
    %v1321 = vunpack.c.l.b16 %v752
    %v1322 = vunpack.c.h.b16 %v752
    %v1323 = vunpack.c.l.b16 %v753
    %v1324 = vunpack.c.h.b16 %v753
    %v1325 = vunpack.c.l.b16 %v754
    %v1326 = vunpack.c.h.b16 %v754
    %v1327 = vunpack.c.l.b16 %v755
    %v1328 = vunpack.c.h.b16 %v755
    %v1329 = vunpack.c.l.b16 %v756
    %v1330 = vunpack.c.h.b16 %v756
    %v1331 = vunpack.c.l.b16 %v757
    %v1332 = vunpack.c.h.b16 %v757
    %v1333 = vunpack.c.l.b16 %v758
    %v1334 = vunpack.c.h.b16 %v758
    %v1335 = vunpack.c.l.b16 %v759
    %v1336 = vunpack.c.h.b16 %v759
    %v1337 = vunpack.c.l.b16 %v760
    %v1338 = vunpack.c.h.b16 %v760
    %v1339 = vunpack.c.l.b16 %v761
    %v1340 = vunpack.c.h.b16 %v761
    %v1341 = vunpack.c.l.b16 %v762
    %v1342 = vunpack.c.h.b16 %v762
    %v1343 = vunpack.c.l.b16 %v763
    %v1344 = vunpack.c.h.b16 %v763
    %v1345 = vunpack.c.l.b16 %v764
    %v1346 = vunpack.c.h.b16 %v764
    %v1347 = vunpack.c.l.b16 %v765
    %v1348 = vunpack.c.h.b16 %v765
    %v1349 = vunpack.c.l.b16 %v766
    %v1350 = vunpack.c.h.b16 %v766
    %v1351 = vunpack.c.l.b16 %v767
    %v1352 = vunpack.c.h.b16 %v767
    %v1353 = vunpack.c.l.b16 %v768
    %v1354 = vunpack.c.h.b16 %v768
    %v1355 = vunpack.c.l.b16 %v769
    %v1356 = vunpack.c.h.b16 %v769
    %v1357 = vunpack.c.l.b16 %v770
    %v1358 = vunpack.c.h.b16 %v770
    %v1359 = vunpack.c.l.b16 %v771
    %v1360 = vunpack.c.h.b16 %v771
    %v1361 = vunpack.c.l.b16 %v772
    %v1362 = vunpack.c.h.b16 %v772
    %v1363 = vunpack.c.l.b16 %v773
    %v1364 = vunpack.c.h.b16 %v773
    %v1365 = vunpack.c.l.b16 %v774
    %v1366 = vunpack.c.h.b16 %v774
    %v1367 = vunpack.c.l.b16 %v775
    %v1368 = vunpack.c.h.b16 %v775
    %v1369 = vunpack.c.l.b16 %v776
    %v1370 = vunpack.c.h.b16 %v776
    %v1371 = vunpack.c.l.b16 %v777
    %v1372 = vunpack.c.h.b16 %v777
    %v1373 = vunpack.c.l.b16 %v778
    %v1374 = vunpack.c.h.b16 %v778
    %v1375 = vunpack.c.l.b16 %v779
    %v1376 = vunpack.c.h.b16 %v779
    %v1377 = vunpack.c.l.b16 %v780
    %v1378 = vunpack.c.h.b16 %v780
    %v1379 = vunpack.c.l.b16 %v781
    %v1380 = vunpack.c.h.b16 %v781
    %v1381 = vunpack.c.l.b16 %v782
    %v1382 = vunpack.c.h.b16 %v782
    %v1383 = vunpack.c.l.b16 %v783
    %v1384 = vunpack.c.h.b16 %v783
    %v1385 = vunpack.c.l.b16 %v784
    %v1386 = vunpack.c.h.b16 %v784
    %v1387 = vunpack.c.l.b16 %v785
    %v1388 = vunpack.c.h.b16 %v785
    %v1389 = vunpack.c.l.b16 %v786
    %v1390 = vunpack.c.h.b16 %v786
    %v1391 = vunpack.c.l.b16 %v787
    %v1392 = vunpack.c.h.b16 %v787
    %v1393 = vunpack.c.l.b16 %v788
    %v1394 = vunpack.c.h.b16 %v788
    %v1395 = vunpack.c.l.b16 %v789
    %v1396 = vunpack.c.h.b16 %v789
    %v1397 = vunpack.c.l.b16 %v790
    %v1398 = vunpack.c.h.b16 %v790
    %v1399 = vunpack.c.l.b16 %v791
    %v1400 = vunpack.c.h.b16 %v791
    %v1401 = vunpack.c.l.b16 %v792
    %v1402 = vunpack.c.h.b16 %v792
    %v1403 = vunpack.c.l.b16 %v793
    %v1404 = vunpack.c.h.b16 %v793
    %v1405 = vunpack.c.l.b16 %v794
    %v1406 = vunpack.c.h.b16 %v794
    %v1407 = vunpack.c.l.b16 %v795
    %v1408 = vunpack.c.h.b16 %v795
    %v1409 = vunpack.c.l.b16 %v796
    %v1410 = vunpack.c.h.b16 %v796
    %v1411 = vunpack.c.l.b16 %v797
    %v1412 = vunpack.c.h.b16 %v797
    %v1413 = vunpack.c.l.b16 %v798
    %v1414 = vunpack.c.h.b16 %v798
    %v1415 = vunpack.c.l.b16 %v799
    %v1416 = vunpack.c.h.b16 %v799
    %v1417 = vunpack.c.l.b16 %v800
    %v1418 = vunpack.c.h.b16 %v800
    %v1419 = vunpack.c.l.b16 %v801
    %v1420 = vunpack.c.h.b16 %v801
    %v1421 = vunpack.c.l.b16 %v802
    %v1422 = vunpack.c.h.b16 %v802
    %v1423 = vunpack.c.l.b16 %v803
    %v1424 = vunpack.c.h.b16 %v803
    %v1425 = vunpack.c.l.b16 %v804
    %v1426 = vunpack.c.h.b16 %v804
    %v1427 = vunpack.c.l.b16 %v805
    %v1428 = vunpack.c.h.b16 %v805
    %v1429 = vunpack.c.l.b16 %v806
    %v1430 = vunpack.c.h.b16 %v806
    %v1431 = vunpack.c.l.b16 %v807
    %v1432 = vunpack.c.h.b16 %v807
    %v1433 = vunpack.c.l.b16 %v808
    %v1434 = vunpack.c.h.b16 %v808
    %v1435 = vunpack.c.l.b16 %v809
    %v1436 = vunpack.c.h.b16 %v809
    %v1437 = vunpack.c.l.b16 %v810
    %v1438 = vunpack.c.h.b16 %v810
    %v1439 = vunpack.c.l.b16 %v811
    %v1440 = vunpack.c.h.b16 %v811
    %v1441 = vunpack.c.l.b16 %v812
    %v1442 = vunpack.c.h.b16 %v812
    %v1443 = vunpack.c.l.b16 %v813
    %v1444 = vunpack.c.h.b16 %v813
    %v1445 = vunpack.c.l.b16 %v814
    %v1446 = vunpack.c.h.b16 %v814
    %v1447 = vunpack.c.l.b16 %v815
    %v1448 = vunpack.c.h.b16 %v815
    %v1449 = vunpack.c.l.b16 %v816
    %v1450 = vunpack.c.h.b16 %v816
    %v1451 = vunpack.c.l.b16 %v817
    %v1452 = vunpack.c.h.b16 %v817
    %v1453 = vunpack.c.l.b16 %v818
    %v1454 = vunpack.c.h.b16 %v818
    %v1455 = vunpack.c.l.b16 %v819
    %v1456 = vunpack.c.h.b16 %v819
    %v1457 = vunpack.c.l.b16 %v820
    %v1458 = vunpack.c.h.b16 %v820
    %v1459 = vunpack.c.l.b16 %v821
    %v1460 = vunpack.c.h.b16 %v821
    %v1461 = vunpack.c.l.b16 %v822
    %v1462 = vunpack.c.h.b16 %v822
    %v1463 = vunpack.c.l.b16 %v823
    %v1464 = vunpack.c.h.b16 %v823
    %v1465 = vunpack.c.l.b16 %v824
    %v1466 = vunpack.c.h.b16 %v824
    %v1467 = vunpack.c.l.b16 %v825
    %v1468 = vunpack.c.h.b16 %v825
    %v1469 = vunpack.c.l.b16 %v826
    %v1470 = vunpack.c.h.b16 %v826
    %v1471 = vunpack.c.l.b16 %v827
    %v1472 = vunpack.c.h.b16 %v827
    %v1473 = vunpack.c.l.b16 %v828
    %v1474 = vunpack.c.h.b16 %v828
    %v1475 = vunpack.c.l.b16 %v829
    %v1476 = vunpack.c.h.b16 %v829
    %v1477 = vunpack.c.l.b16 %v830
    %v1478 = vunpack.c.h.b16 %v830
    %v1479 = vunpack.c.l.b16 %v831
    %v1480 = vunpack.c.h.b16 %v831
    %v1481 = vunpack.c.l.b16 %v832
    %v1482 = vunpack.c.h.b16 %v832
    %v1483 = vunpack.c.l.b16 %v833
    %v1484 = vunpack.c.h.b16 %v833
    %v1485 = vunpack.c.l.b16 %v834
    %v1486 = vunpack.c.h.b16 %v834
    %v1487 = vunpack.c.l.b16 %v835
    %v1488 = vunpack.c.h.b16 %v835
    %v1489 = vunpack.c.l.b16 %v836
    %v1490 = vunpack.c.h.b16 %v836
    %v1491 = vunpack.c.l.b16 %v837
    %v1492 = vunpack.c.h.b16 %v837
    %v1493 = vunpack.c.l.b16 %v838
    %v1494 = vunpack.c.h.b16 %v838
    %v1495 = vunpack.c.l.b16 %v839
    %v1496 = vunpack.c.h.b16 %v839
    %v1497 = vunpack.c.l.b16 %v840
    %v1498 = vunpack.c.h.b16 %v840
    %v1499 = vunpack.c.l.b16 %v841
    %v1500 = vunpack.c.h.b16 %v841
    %v1501 = vunpack.c.l.b16 %v842
    %v1502 = vunpack.c.h.b16 %v842
    %v1503 = vunpack.c.l.b16 %v843
    %v1504 = vunpack.c.h.b16 %v843
    %v1505 = vunpack.c.l.b16 %v844
    %v1506 = vunpack.c.h.b16 %v844
    %v1507 = vunpack.c.l.b16 %v845
    %v1508 = vunpack.c.h.b16 %v845
    %v1509 = vunpack.c.l.b16 %v846
    %v1510 = vunpack.c.h.b16 %v846
    %v1511 = vunpack.c.l.b16 %v847
    %v1512 = vunpack.c.h.b16 %v847
    %v1513 = vunpack.c.l.b16 %v848
    %v1514 = vunpack.c.h.b16 %v848
    %v1515 = vunpack.c.l.b16 %v849
    %v1516 = vunpack.c.h.b16 %v849
    %v1517 = vunpack.c.l.b16 %v850
    %v1518 = vunpack.c.h.b16 %v850
    %v1519 = vunpack.c.l.b16 %v851
    %v1520 = vunpack.c.h.b16 %v851
    %v1521 = vunpack.c.l.b16 %v852
    %v1522 = vunpack.c.h.b16 %v852
    %v1523 = vunpack.c.l.b16 %v853
    %v1524 = vunpack.c.h.b16 %v853
    %v1525 = vunpack.c.l.b16 %v854
    %v1526 = vunpack.c.h.b16 %v854
    %v1527 = vunpack.c.l.b16 %v855
    %v1528 = vunpack.c.h.b16 %v855
    %v1529 = vunpack.c.l.b16 %v856
    %v1530 = vunpack.c.h.b16 %v856
    %v1531 = vunpack.c.l.b16 %v857
    %v1532 = vunpack.c.h.b16 %v857
    %v1533 = vunpack.c.l.b16 %v858
    %v1534 = vunpack.c.h.b16 %v858
    %v1535 = vunpack.c.l.b16 %v859
    %v1536 = vunpack.c.h.b16 %v859
    %v1537 = vunpack.c.l.b16 %v860
    %v1538 = vunpack.c.h.b16 %v860
    %v1539 = vunpack.c.l.b16 %v861
    %v1540 = vunpack.c.h.b16 %v861
    %v1541 = vunpack.c.l.b16 %v862
    %v1542 = vunpack.c.h.b16 %v862
    %v1543 = vunpack.c.l.b16 %v863
    %v1544 = vunpack.c.h.b16 %v863
    %v1545 = vunpack.c.l.b16 %v864
    %v1546 = vunpack.c.h.b16 %v864
    %v1547 = vunpack.c.l.b16 %v865
    %v1548 = vunpack.c.h.b16 %v865
    %v1549 = vunpack.c.l.b16 %v866
    %v1550 = vunpack.c.h.b16 %v866
    %v1551 = vunpack.c.l.b16 %v867
    %v1552 = vunpack.c.h.b16 %v867
    %v1553 = vunpack.c.l.b16 %v868
    %v1554 = vunpack.c.h.b16 %v868
    %v1555 = vunpack.c.l.b16 %v869
    %v1556 = vunpack.c.h.b16 %v869
    %v1557 = vunpack.c.l.b16 %v870
    %v1558 = vunpack.c.h.b16 %v870
    %v1559 = vunpack.c.l.b16 %v871
    %v1560 = vunpack.c.h.b16 %v871
    %v1561 = vunpack.c.l.b16 %v872
    %v1562 = vunpack.c.h.b16 %v872
    %v1563 = vunpack.c.l.b16 %v873
    %v1564 = vunpack.c.h.b16 %v873
    %v1565 = vunpack.c.l.b16 %v874
    %v1566 = vunpack.c.h.b16 %v874
    %v1567 = vunpack.c.l.b16 %v875
    %v1568 = vunpack.c.h.b16 %v875
    %v1569 = vunpack.c.l.b16 %v876
    %v1570 = vunpack.c.h.b16 %v876
    %v1571 = vunpack.c.l.b16 %v877
    %v1572 = vunpack.c.h.b16 %v877
    %v1573 = vunpack.c.l.b16 %v878
    %v1574 = vunpack.c.h.b16 %v878
    %v1575 = vunpack.c.l.b16 %v879
    %v1576 = vunpack.c.h.b16 %v879
    %v1577 = vunpack.c.l.b16 %v880
    %v1578 = vunpack.c.h.b16 %v880
    %v1579 = vunpack.c.l.b16 %v881
    %v1580 = vunpack.c.h.b16 %v881
    %v1581 = vunpack.c.l.b16 %v882
    %v1582 = vunpack.c.h.b16 %v882
    %v1583 = vunpack.c.l.b16 %v883
    %v1584 = vunpack.c.h.b16 %v883
    %v1585 = vunpack.c.l.b16 %v884
    %v1586 = vunpack.c.h.b16 %v884
    %v1587 = vunpack.c.l.b16 %v885
    %v1588 = vunpack.c.h.b16 %v885
    %v1589 = vunpack.c.l.b16 %v886
    %v1590 = vunpack.c.h.b16 %v886
    %v1591 = vunpack.c.l.b16 %v887
    %v1592 = vunpack.c.h.b16 %v887
    %v1593 = vunpack.c.l.b16 %v888
    %v1594 = vunpack.c.h.b16 %v888
    %v1595 = vunpack.c.l.b16 %v889
    %v1596 = vunpack.c.h.b16 %v889
    %v1597 = vunpack.c.l.b16 %v890
    %v1598 = vunpack.c.h.b16 %v890
    %v1599 = vunpack.c.l.b16 %v891
    %v1600 = vunpack.c.h.b16 %v891
    %v1601 = vunpack.c.l.b16 %v892
    %v1602 = vunpack.c.h.b16 %v892
    %v1603 = vunpack.c.l.b16 %v893
    %v1604 = vunpack.c.h.b16 %v893
    %v1605 = vunpack.c.l.b16 %v894
    %v1606 = vunpack.c.h.b16 %v894
    %v1607 = vunpack.c.l.b16 %v895
    %v1608 = vunpack.c.h.b16 %v895
    %v1609 = vunpack.c.l.b16 %v896
    %v1610 = vunpack.c.h.b16 %v896
    %v1611 = vunpack.c.l.b16 %v897
    %v1612 = vunpack.c.h.b16 %v897
    %v1613 = vunpack.c.l.b16 %v898
    %v1614 = vunpack.c.h.b16 %v898
    %v1615 = vunpack.c.l.b16 %v899
    %v1616 = vunpack.c.h.b16 %v899
    %v1617 = vunpack.c.l.b16 %v900
    %v1618 = vunpack.c.h.b16 %v900
    %v1619 = vunpack.c.l.b16 %v901
    %v1620 = vunpack.c.h.b16 %v901
    %v1621 = vunpack.c.l.b16 %v902
    %v1622 = vunpack.c.h.b16 %v902
    %v1623 = vunpack.c.l.b16 %v903
    %v1624 = vunpack.c.h.b16 %v903
    %v1625 = vunpack.c.l.b16 %v904
    %v1626 = vunpack.c.h.b16 %v904
    %v1627 = vunpack.c.l.b16 %v905
    %v1628 = vunpack.c.h.b16 %v905
    %v1629 = vunpack.c.l.b16 %v906
    %v1630 = vunpack.c.h.b16 %v906
    %v1631 = vunpack.c.l.b16 %v907
    %v1632 = vunpack.c.h.b16 %v907
    %v1633 = vunpack.c.l.b16 %v908
    %v1634 = vunpack.c.h.b16 %v908
    %v1635 = vunpack.c.l.b16 %v909
    %v1636 = vunpack.c.h.b16 %v909
    %v1637 = vunpack.c.l.b16 %v910
    %v1638 = vunpack.c.h.b16 %v910
    %v1639 = vunpack.c.l.b16 %v911
    %v1640 = vunpack.c.h.b16 %v911
    %v1641 = vunpack.c.l.b16 %v912
    %v1642 = vunpack.c.h.b16 %v912
    %v1643 = vunpack.c.l.b16 %v913
    %v1644 = vunpack.c.h.b16 %v913
    %v1645 = vunpack.c.l.b16 %v914
    %v1646 = vunpack.c.h.b16 %v914
    %v1647 = vunpack.c.l.b16 %v915
    %v1648 = vunpack.c.h.b16 %v915
    %v1649 = vunpack.c.l.b16 %v916
    %v1650 = vunpack.c.h.b16 %v916
    %v1651 = vunpack.c.l.b16 %v917
    %v1652 = vunpack.c.h.b16 %v917
    %v1653 = vunpack.c.l.b16 %v918
    %v1654 = vunpack.c.h.b16 %v918
    %v1655 = vunpack.c.l.b16 %v919
    %v1656 = vunpack.c.h.b16 %v919
    %v1657 = vunpack.c.l.b16 %v920
    %v1658 = vunpack.c.h.b16 %v920
    %v1659 = vunpack.c.l.b16 %v921
    %v1660 = vunpack.c.h.b16 %v921
    %v1661 = vunpack.c.l.b16 %v922
    %v1662 = vunpack.c.h.b16 %v922
    %v1663 = vunpack.c.l.b16 %v923
    %v1664 = vunpack.c.h.b16 %v923
    %v1665 = vunpack.c.l.b16 %v924
    %v1666 = vunpack.c.h.b16 %v924
    %v1667 = vunpack.c.l.b16 %v925
    %v1668 = vunpack.c.h.b16 %v925
    %v1669 = vunpack.c.l.b16 %v926
    %v1670 = vunpack.c.h.b16 %v926
    %v1671 = vunpack.c.l.b16 %v927
    %v1672 = vunpack.c.h.b16 %v927
    %v1673 = vunpack.c.l.b16 %v928
    %v1674 = vunpack.c.h.b16 %v928
    %v1675 = vunpack.c.l.b16 %v929
    %v1676 = vunpack.c.h.b16 %v929
    %v1677 = vunpack.c.l.b16 %v930
    %v1678 = vunpack.c.h.b16 %v930
    %v1679 = vunpack.c.l.b16 %v931
    %v1680 = vunpack.c.h.b16 %v931
    %v1681 = vunpack.c.l.b16 %v932
    %v1682 = vunpack.c.h.b16 %v932
    %v1683 = vunpack.c.l.b16 %v933
    %v1684 = vunpack.c.h.b16 %v933
    %v1685 = vunpack.c.l.b16 %v934
    %v1686 = vunpack.c.h.b16 %v934
    %v1687 = vunpack.c.l.b16 %v935
    %v1688 = vunpack.c.h.b16 %v935
    %v1689 = vunpack.c.l.b16 %v936
    %v1690 = vunpack.c.h.b16 %v936
    %v1691 = vunpack.c.l.b16 %v937
    %v1692 = vunpack.c.h.b16 %v937
    %v1693 = vunpack.c.l.b16 %v938
    %v1694 = vunpack.c.h.b16 %v938
    %v1695 = vunpack.c.l.b16 %v939
    %v1696 = vunpack.c.h.b16 %v939
    %v1697 = vunpack.c.l.b16 %v940
    %v1698 = vunpack.c.h.b16 %v940
    %v1699 = vunpack.c.l.b16 %v941
    %v1700 = vunpack.c.h.b16 %v941
    %v1701 = vunpack.c.l.b16 %v942
    %v1702 = vunpack.c.h.b16 %v942
    %v1703 = vunpack.c.l.b16 %v943
    %v1704 = vunpack.c.h.b16 %v943
    %v1705 = vunpack.c.l.b16 %v944
    %v1706 = vunpack.c.h.b16 %v944
    %v1707 = vunpack.c.l.b16 %v945
    %v1708 = vunpack.c.h.b16 %v945
    %v1709 = vunpack.c.l.b16 %v946
    %v1710 = vunpack.c.h.b16 %v946
    %v1711 = vunpack.c.l.b16 %v947
    %v1712 = vunpack.c.h.b16 %v947
    %v1713 = vunpack.c.l.b16 %v948
    %v1714 = vunpack.c.h.b16 %v948
    %v1715 = vunpack.c.l.b16 %v949
    %v1716 = vunpack.c.h.b16 %v949
    %v1717 = vunpack.c.l.b16 %v950
    %v1718 = vunpack.c.h.b16 %v950
    %v1719 = vunpack.c.l.b16 %v951
    %v1720 = vunpack.c.h.b16 %v951
    %v1721 = vunpack.c.l.b16 %v952
    %v1722 = vunpack.c.h.b16 %v952
    %v1723 = vunpack.c.l.b16 %v953
    %v1724 = vunpack.c.h.b16 %v953
    %v1725 = vunpack.c.l.b16 %v954
    %v1726 = vunpack.c.h.b16 %v954
    %v1727 = vunpack.c.l.b16 %v955
    %v1728 = vunpack.c.h.b16 %v955
    %v1729 = vunpack.c.l.b16 %v956
    %v1730 = vunpack.c.h.b16 %v956
    %v1731 = vunpack.c.l.b16 %v957
    %v1732 = vunpack.c.h.b16 %v957
    %v1733 = vunpack.c.l.b16 %v958
    %v1734 = vunpack.c.h.b16 %v958
    %v1735 = vunpack.c.l.b16 %v959
    %v1736 = vunpack.c.h.b16 %v959
    %v1737 = vunpack.c.l.b16 %v960
    %v1738 = vunpack.c.h.b16 %v960
    %v1739 = vunpack.c.l.b16 %v961
    %v1740 = vunpack.c.h.b16 %v961
    %v1741 = vunpack.c.l.b16 %v962
    %v1742 = vunpack.c.h.b16 %v962
    %v1743 = vunpack.c.l.b16 %v963
    %v1744 = vunpack.c.h.b16 %v963
    %v1745 = vunpack.c.l.b16 %v964
    %v1746 = vunpack.c.h.b16 %v964
    %v1747 = vunpack.c.l.b16 %v965
    %v1748 = vunpack.c.h.b16 %v965
    %v1749 = vunpack.c.l.b16 %v966
    %v1750 = vunpack.c.h.b16 %v966
    %v1751 = vunpack.c.l.b16 %v967
    %v1752 = vunpack.c.h.b16 %v967
    %v1753 = vunpack.c.l.b16 %v968
    %v1754 = vunpack.c.h.b16 %v968
    %v1755 = vunpack.c.l.b16 %v969
    %v1756 = vunpack.c.h.b16 %v969
    %v1757 = vunpack.c.l.b16 %v970
    %v1758 = vunpack.c.h.b16 %v970
    %v1759 = vunpack.c.l.b16 %v971
    %v1760 = vunpack.c.h.b16 %v971
    %v1761 = vunpack.c.l.b16 %v972
    %v1762 = vunpack.c.h.b16 %v972
    %v1763 = vunpack.c.l.b16 %v973
    %v1764 = vunpack.c.h.b16 %v973
    %v1765 = vunpack.c.l.b16 %v974
    %v1766 = vunpack.c.h.b16 %v974
    %v1767 = vunpack.c.l.b16 %v975
    %v1768 = vunpack.c.h.b16 %v975
    %v1769 = vunpack.c.l.b16 %v976
    %v1770 = vunpack.c.h.b16 %v976
    %v1771 = vunpack.c.l.b16 %v977
    %v1772 = vunpack.c.h.b16 %v977
    %v1773 = vunpack.c.l.b16 %v978
    %v1774 = vunpack.c.h.b16 %v978
    %v1775 = vunpack.c.l.b16 %v979
    %v1776 = vunpack.c.h.b16 %v979
    %v1777 = vunpack.c.l.b16 %v980
    %v1778 = vunpack.c.h.b16 %v980
    %v1779 = vunpack.c.l.b16 %v981
    %v1780 = vunpack.c.h.b16 %v981
    %v1781 = vunpack.c.l.b16 %v982
    %v1782 = vunpack.c.h.b16 %v982
    %v1783 = vunpack.c.l.b16 %v983
    %v1784 = vunpack.c.h.b16 %v983
    %v1785 = vunpack.c.l.b16 %v984
    %v1786 = vunpack.c.h.b16 %v984
    %v1787 = vunpack.c.l.b16 %v985
    %v1788 = vunpack.c.h.b16 %v985
    %v1789 = vunpack.c.l.b16 %v986
    %v1790 = vunpack.c.h.b16 %v986
    %v1791 = vunpack.c.l.b16 %v987
    %v1792 = vunpack.c.h.b16 %v987
    %v1793 = vunpack.c.l.b16 %v988
    %v1794 = vunpack.c.h.b16 %v988
    %v1795 = vunpack.c.l.b16 %v989
    %v1796 = vunpack.c.h.b16 %v989
    %v1797 = vunpack.c.l.b16 %v990
    %v1798 = vunpack.c.h.b16 %v990
    %v1799 = vunpack.c.l.b16 %v991
    %v1800 = vunpack.c.h.b16 %v991
    %v1801 = vunpack.c.l.b16 %v992
    %v1802 = vunpack.c.h.b16 %v992
    %v1803 = vpack.c.b16 %v1299, %v1291
    %v1804 = vpack.c.b16 %v1300, %v1292
    %v1805 = vpack.c.b16 %v1301, %v1293
    %v1806 = vpack.c.b16 %v1302, %v1294
    %v1807 = vpack.c.b16 %v1303, %v1295
    %v1808 = vpack.c.b16 %v1304, %v1296
    %v1809 = vpack.c.b16 %v1305, %v1297
    %v1810 = vpack.c.b16 %v1306, %v1298
    %v1811 = vpack.c.b16 %v1315, %v1307
    %v1812 = vpack.c.b16 %v1316, %v1308
    %v1813 = vpack.c.b16 %v1317, %v1309
    %v1814 = vpack.c.b16 %v1318, %v1310
    %v1815 = vpack.c.b16 %v1319, %v1311
    %v1816 = vpack.c.b16 %v1320, %v1312
    %v1817 = vpack.c.b16 %v1321, %v1313
    %v1818 = vpack.c.b16 %v1322, %v1314
    %v1819 = vpack.c.b16 %v1331, %v1323
    %v1820 = vpack.c.b16 %v1332, %v1324
    %v1821 = vpack.c.b16 %v1333, %v1325
    %v1822 = vpack.c.b16 %v1334, %v1326
    %v1823 = vpack.c.b16 %v1335, %v1327
    %v1824 = vpack.c.b16 %v1336, %v1328
    %v1825 = vpack.c.b16 %v1337, %v1329
    %v1826 = vpack.c.b16 %v1338, %v1330
    %v1827 = vpack.c.b16 %v1347, %v1339
    %v1828 = vpack.c.b16 %v1348, %v1340
    %v1829 = vpack.c.b16 %v1349, %v1341
    %v1830 = vpack.c.b16 %v1350, %v1342
    %v1831 = vpack.c.b16 %v1351, %v1343
    %v1832 = vpack.c.b16 %v1352, %v1344
    %v1833 = vpack.c.b16 %v1353, %v1345
    %v1834 = vpack.c.b16 %v1354, %v1346
    %v1835 = vpack.c.b16 %v1363, %v1355
    %v1836 = vpack.c.b16 %v1364, %v1356
    %v1837 = vpack.c.b16 %v1365, %v1357
    %v1838 = vpack.c.b16 %v1366, %v1358
    %v1839 = vpack.c.b16 %v1367, %v1359
    %v1840 = vpack.c.b16 %v1368, %v1360
    %v1841 = vpack.c.b16 %v1369, %v1361
    %v1842 = vpack.c.b16 %v1370, %v1362
    %v1843 = vpack.c.b16 %v1379, %v1371
    %v1844 = vpack.c.b16 %v1380, %v1372
    %v1845 = vpack.c.b16 %v1381, %v1373
    %v1846 = vpack.c.b16 %v1382, %v1374
    %v1847 = vpack.c.b16 %v1383, %v1375
    %v1848 = vpack.c.b16 %v1384, %v1376
    %v1849 = vpack.c.b16 %v1385, %v1377
    %v1850 = vpack.c.b16 %v1386, %v1378
    %v1851 = vpack.c.b16 %v1395, %v1387
    %v1852 = vpack.c.b16 %v1396, %v1388
    %v1853 = vpack.c.b16 %v1397, %v1389
    %v1854 = vpack.c.b16 %v1398, %v1390
    %v1855 = vpack.c.b16 %v1399, %v1391
    %v1856 = vpack.c.b16 %v1400, %v1392
    %v1857 = vpack.c.b16 %v1401, %v1393
    %v1858 = vpack.c.b16 %v1402, %v1394
    %v1859 = vpack.c.b16 %v1411, %v1403
    %v1860 = vpack.c.b16 %v1412, %v1404
    %v1861 = vpack.c.b16 %v1413, %v1405
    %v1862 = vpack.c.b16 %v1414, %v1406
    %v1863 = vpack.c.b16 %v1415, %v1407
    %v1864 = vpack.c.b16 %v1416, %v1408
    %v1865 = vpack.c.b16 %v1417, %v1409
    %v1866 = vpack.c.b16 %v1418, %v1410
    %v1867 = vpack.c.b16 %v1427, %v1419
    %v1868 = vpack.c.b16 %v1428, %v1420
    %v1869 = vpack.c.b16 %v1429, %v1421
    %v1870 = vpack.c.b16 %v1430, %v1422
    %v1871 = vpack.c.b16 %v1431, %v1423
    %v1872 = vpack.c.b16 %v1432, %v1424
    %v1873 = vpack.c.b16 %v1433, %v1425
    %v1874 = vpack.c.b16 %v1434, %v1426
    %v1875 = vpack.c.b16 %v1443, %v1435
    %v1876 = vpack.c.b16 %v1444, %v1436
    %v1877 = vpack.c.b16 %v1445, %v1437
    %v1878 = vpack.c.b16 %v1446, %v1438
    %v1879 = vpack.c.b16 %v1447, %v1439
    %v1880 = vpack.c.b16 %v1448, %v1440
    %v1881 = vpack.c.b16 %v1449, %v1441
    %v1882 = vpack.c.b16 %v1450, %v1442
    %v1883 = vpack.c.b16 %v1459, %v1451
    %v1884 = vpack.c.b16 %v1460, %v1452
    %v1885 = vpack.c.b16 %v1461, %v1453
    %v1886 = vpack.c.b16 %v1462, %v1454
    %v1887 = vpack.c.b16 %v1463, %v1455
    %v1888 = vpack.c.b16 %v1464, %v1456
    %v1889 = vpack.c.b16 %v1465, %v1457
    %v1890 = vpack.c.b16 %v1466, %v1458
    %v1891 = vpack.c.b16 %v1475, %v1467
    %v1892 = vpack.c.b16 %v1476, %v1468
    %v1893 = vpack.c.b16 %v1477, %v1469
    %v1894 = vpack.c.b16 %v1478, %v1470
    %v1895 = vpack.c.b16 %v1479, %v1471
    %v1896 = vpack.c.b16 %v1480, %v1472
    %v1897 = vpack.c.b16 %v1481, %v1473
    %v1898 = vpack.c.b16 %v1482, %v1474
    %v1899 = vpack.c.b16 %v1491, %v1483
    %v1900 = vpack.c.b16 %v1492, %v1484
    %v1901 = vpack.c.b16 %v1493, %v1485
    %v1902 = vpack.c.b16 %v1494, %v1486
    %v1903 = vpack.c.b16 %v1495, %v1487
    %v1904 = vpack.c.b16 %v1496, %v1488
    %v1905 = vpack.c.b16 %v1497, %v1489
    %v1906 = vpack.c.b16 %v1498, %v1490
    %v1907 = vpack.c.b16 %v1507, %v1499
    %v1908 = vpack.c.b16 %v1508, %v1500
    %v1909 = vpack.c.b16 %v1509, %v1501
    %v1910 = vpack.c.b16 %v1510, %v1502
    %v1911 = vpack.c.b16 %v1511, %v1503
    %v1912 = vpack.c.b16 %v1512, %v1504
    %v1913 = vpack.c.b16 %v1513, %v1505
    %v1914 = vpack.c.b16 %v1514, %v1506
    %v1915 = vpack.c.b16 %v1523, %v1515
    %v1916 = vpack.c.b16 %v1524, %v1516
    %v1917 = vpack.c.b16 %v1525, %v1517
    %v1918 = vpack.c.b16 %v1526, %v1518
    %v1919 = vpack.c.b16 %v1527, %v1519
    %v1920 = vpack.c.b16 %v1528, %v1520
    %v1921 = vpack.c.b16 %v1529, %v1521
    %v1922 = vpack.c.b16 %v1530, %v1522
    %v1923 = vpack.c.b16 %v1539, %v1531
    %v1924 = vpack.c.b16 %v1540, %v1532
    %v1925 = vpack.c.b16 %v1541, %v1533
    %v1926 = vpack.c.b16 %v1542, %v1534
    %v1927 = vpack.c.b16 %v1543, %v1535
    %v1928 = vpack.c.b16 %v1544, %v1536
    %v1929 = vpack.c.b16 %v1545, %v1537
    %v1930 = vpack.c.b16 %v1546, %v1538
    %v1931 = vpack.c.b16 %v1555, %v1547
    %v1932 = vpack.c.b16 %v1556, %v1548
    %v1933 = vpack.c.b16 %v1557, %v1549
    %v1934 = vpack.c.b16 %v1558, %v1550
    %v1935 = vpack.c.b16 %v1559, %v1551
    %v1936 = vpack.c.b16 %v1560, %v1552
    %v1937 = vpack.c.b16 %v1561, %v1553
    %v1938 = vpack.c.b16 %v1562, %v1554
    %v1939 = vpack.c.b16 %v1571, %v1563
    %v1940 = vpack.c.b16 %v1572, %v1564
    %v1941 = vpack.c.b16 %v1573, %v1565
    %v1942 = vpack.c.b16 %v1574, %v1566
    %v1943 = vpack.c.b16 %v1575, %v1567
    %v1944 = vpack.c.b16 %v1576, %v1568
    %v1945 = vpack.c.b16 %v1577, %v1569
    %v1946 = vpack.c.b16 %v1578, %v1570
    %v1947 = vpack.c.b16 %v1587, %v1579
    %v1948 = vpack.c.b16 %v1588, %v1580
    %v1949 = vpack.c.b16 %v1589, %v1581
    %v1950 = vpack.c.b16 %v1590, %v1582
    %v1951 = vpack.c.b16 %v1591, %v1583
    %v1952 = vpack.c.b16 %v1592, %v1584
    %v1953 = vpack.c.b16 %v1593, %v1585
    %v1954 = vpack.c.b16 %v1594, %v1586
    %v1955 = vpack.c.b16 %v1603, %v1595
    %v1956 = vpack.c.b16 %v1604, %v1596
    %v1957 = vpack.c.b16 %v1605, %v1597
    %v1958 = vpack.c.b16 %v1606, %v1598
    %v1959 = vpack.c.b16 %v1607, %v1599
    %v1960 = vpack.c.b16 %v1608, %v1600
    %v1961 = vpack.c.b16 %v1609, %v1601
    %v1962 = vpack.c.b16 %v1610, %v1602
    %v1963 = vpack.c.b16 %v1619, %v1611
    %v1964 = vpack.c.b16 %v1620, %v1612
    %v1965 = vpack.c.b16 %v1621, %v1613
    %v1966 = vpack.c.b16 %v1622, %v1614
    %v1967 = vpack.c.b16 %v1623, %v1615
    %v1968 = vpack.c.b16 %v1624, %v1616
    %v1969 = vpack.c.b16 %v1625, %v1617
    %v1970 = vpack.c.b16 %v1626, %v1618
    %v1971 = vpack.c.b16 %v1635, %v1627
    %v1972 = vpack.c.b16 %v1636, %v1628
    %v1973 = vpack.c.b16 %v1637, %v1629
    %v1974 = vpack.c.b16 %v1638, %v1630
    %v1975 = vpack.c.b16 %v1639, %v1631
    %v1976 = vpack.c.b16 %v1640, %v1632
    %v1977 = vpack.c.b16 %v1641, %v1633
    %v1978 = vpack.c.b16 %v1642, %v1634
    %v1979 = vpack.c.b16 %v1651, %v1643
    %v1980 = vpack.c.b16 %v1652, %v1644
    %v1981 = vpack.c.b16 %v1653, %v1645
    %v1982 = vpack.c.b16 %v1654, %v1646
    %v1983 = vpack.c.b16 %v1655, %v1647
    %v1984 = vpack.c.b16 %v1656, %v1648
    %v1985 = vpack.c.b16 %v1657, %v1649
    %v1986 = vpack.c.b16 %v1658, %v1650
    %v1987 = vpack.c.b16 %v1667, %v1659
    %v1988 = vpack.c.b16 %v1668, %v1660
    %v1989 = vpack.c.b16 %v1669, %v1661
    %v1990 = vpack.c.b16 %v1670, %v1662
    %v1991 = vpack.c.b16 %v1671, %v1663
    %v1992 = vpack.c.b16 %v1672, %v1664
    %v1993 = vpack.c.b16 %v1673, %v1665
    %v1994 = vpack.c.b16 %v1674, %v1666
    %v1995 = vpack.c.b16 %v1683, %v1675
    %v1996 = vpack.c.b16 %v1684, %v1676
    %v1997 = vpack.c.b16 %v1685, %v1677
    %v1998 = vpack.c.b16 %v1686, %v1678
    %v1999 = vpack.c.b16 %v1687, %v1679
    %v2000 = vpack.c.b16 %v1688, %v1680
    %v2001 = vpack.c.b16 %v1689, %v1681
    %v2002 = vpack.c.b16 %v1690, %v1682
    %v2003 = vpack.c.b16 %v1699, %v1691
    %v2004 = vpack.c.b16 %v1700, %v1692
    %v2005 = vpack.c.b16 %v1701, %v1693
    %v2006 = vpack.c.b16 %v1702, %v1694
    %v2007 = vpack.c.b16 %v1703, %v1695
    %v2008 = vpack.c.b16 %v1704, %v1696
    %v2009 = vpack.c.b16 %v1705, %v1697
    %v2010 = vpack.c.b16 %v1706, %v1698
    %v2011 = vpack.c.b16 %v1715, %v1707
    %v2012 = vpack.c.b16 %v1716, %v1708
    %v2013 = vpack.c.b16 %v1717, %v1709
    %v2014 = vpack.c.b16 %v1718, %v1710
    %v2015 = vpack.c.b16 %v1719, %v1711
    %v2016 = vpack.c.b16 %v1720, %v1712
    %v2017 = vpack.c.b16 %v1721, %v1713
    %v2018 = vpack.c.b16 %v1722, %v1714
    %v2019 = vpack.c.b16 %v1731, %v1723
    %v2020 = vpack.c.b16 %v1732, %v1724
    %v2021 = vpack.c.b16 %v1733, %v1725
    %v2022 = vpack.c.b16 %v1734, %v1726
    %v2023 = vpack.c.b16 %v1735, %v1727
    %v2024 = vpack.c.b16 %v1736, %v1728
    %v2025 = vpack.c.b16 %v1737, %v1729
    %v2026 = vpack.c.b16 %v1738, %v1730
    %v2027 = vpack.c.b16 %v1747, %v1739
    %v2028 = vpack.c.b16 %v1748, %v1740
    %v2029 = vpack.c.b16 %v1749, %v1741
    %v2030 = vpack.c.b16 %v1750, %v1742
    %v2031 = vpack.c.b16 %v1751, %v1743
    %v2032 = vpack.c.b16 %v1752, %v1744
    %v2033 = vpack.c.b16 %v1753, %v1745
    %v2034 = vpack.c.b16 %v1754, %v1746
    %v2035 = vpack.c.b16 %v1763, %v1755
    %v2036 = vpack.c.b16 %v1764, %v1756
    %v2037 = vpack.c.b16 %v1765, %v1757
    %v2038 = vpack.c.b16 %v1766, %v1758
    %v2039 = vpack.c.b16 %v1767, %v1759
    %v2040 = vpack.c.b16 %v1768, %v1760
    %v2041 = vpack.c.b16 %v1769, %v1761
    %v2042 = vpack.c.b16 %v1770, %v1762
    %v2043 = vpack.c.b16 %v1779, %v1771
    %v2044 = vpack.c.b16 %v1780, %v1772
    %v2045 = vpack.c.b16 %v1781, %v1773
    %v2046 = vpack.c.b16 %v1782, %v1774
    %v2047 = vpack.c.b16 %v1783, %v1775
    %v2048 = vpack.c.b16 %v1784, %v1776
    %v2049 = vpack.c.b16 %v1785, %v1777
    %v2050 = vpack.c.b16 %v1786, %v1778
    %v2051 = vpack.c.b16 %v1795, %v1787
    %v2052 = vpack.c.b16 %v1796, %v1788
    %v2053 = vpack.c.b16 %v1797, %v1789
    %v2054 = vpack.c.b16 %v1798, %v1790
    %v2055 = vpack.c.b16 %v1799, %v1791
    %v2056 = vpack.c.b16 %v1800, %v1792
    %v2057 = vpack.c.b16 %v1801, %v1793
    %v2058 = vpack.c.b16 %v1802, %v1794
    %2315 = vmatprep.subr.bf16.mxu0 %v1804
    %2316 = vmatpush1.bf16.msra.mxu0 %v1803
    %2317 = vmatprep.subr.bf16.mxu0 %v1812
    %2318 = vmatpush1.bf16.msra.mxu0 %v1811
    %2319 = vmatprep.subr.bf16.mxu0 %v1820
    %2320 = vmatpush1.bf16.msra.mxu0 %v1819
    %2321 = vmatprep.subr.bf16.mxu0 %v1828
    %2322 = vmatpush1.bf16.msra.mxu0 %v1827
    %2323 = vmatprep.subr.bf16.mxu0 %v1836
    %2324 = vmatpush1.bf16.msra.mxu0 %v1835
    %2325 = vmatprep.subr.bf16.mxu0 %v1844
    %2326 = vmatpush1.bf16.msra.mxu0 %v1843
    %2327 = vmatprep.subr.bf16.mxu0 %v1852
    %2328 = vmatpush1.bf16.msra.mxu0 %v1851
    %2329 = vmatprep.subr.bf16.mxu0 %v1860
    %2330 = vmatpush1.bf16.msra.mxu0 %v1859
    %2331 = vmatprep.subr.bf16.mxu0 %v1868
    %2332 = vmatpush1.bf16.msra.mxu0 %v1867
    %2333 = vmatprep.subr.bf16.mxu0 %v1876
    %2334 = vmatpush1.bf16.msra.mxu0 %v1875
    %2335 = vmatprep.subr.bf16.mxu0 %v1884
    %2336 = vmatpush1.bf16.msra.mxu0 %v1883
    %2337 = vmatprep.subr.bf16.mxu0 %v1892
    %2338 = vmatpush1.bf16.msra.mxu0 %v1891
    %2339 = vmatprep.subr.bf16.mxu0 %v1900
    %2340 = vmatpush1.bf16.msra.mxu0 %v1899
    %2341 = vmatprep.subr.bf16.mxu0 %v1908
    %2342 = vmatpush1.bf16.msra.mxu0 %v1907
    %2343 = vmatprep.subr.bf16.mxu0 %v1916
    %2344 = vmatpush1.bf16.msra.mxu0 %v1915
    %2345 = vmatprep.subr.bf16.mxu0 %v1924
    %2346 = vmatpush1.bf16.msra.mxu0 %v1923
    %2347 = vmatprep.mubr.bf16.mxu0 %v734
    %2348 = vmatmul.mubr.bf16.gmra.mrb[0].mxu0 %v733
    %v2349 = vpop.f32.mrb[0].mxu0
    %v2350 = vadd.f32 %v998, %v2349
    %v2351 = vpop.f32.mrb[0].mxu0
    %v2352 = vadd.f32 %v1002, %v2351
    %v2353 = vpop.f32.mrb[0].mxu0
    %v2354 = vpop.f32.mrb[0].mxu0
    %2355 = vdwg.mxu0
    %2356 = vmatprep.subr.bf16.mxu0 %v1932
    %2357 = vmatpush1.bf16.msra.mxu0 %v1931
    %2358 = vmatprep.subr.bf16.mxu0 %v1940
    %2359 = vmatpush1.bf16.msra.mxu0 %v1939
    %2360 = vmatprep.subr.bf16.mxu0 %v1948
    %2361 = vmatpush1.bf16.msra.mxu0 %v1947
    %2362 = vmatprep.subr.bf16.mxu0 %v1956
    %2363 = vmatpush1.bf16.msra.mxu0 %v1955
    %2364 = vmatprep.subr.bf16.mxu0 %v1964
    %2365 = vmatpush1.bf16.msra.mxu0 %v1963
    %2366 = vmatprep.subr.bf16.mxu0 %v1972
    %2367 = vmatpush1.bf16.msra.mxu0 %v1971
    %2368 = vmatprep.subr.bf16.mxu0 %v1980
    %2369 = vmatpush1.bf16.msra.mxu0 %v1979
    %2370 = vmatprep.subr.bf16.mxu0 %v1988
    %2371 = vmatpush1.bf16.msra.mxu0 %v1987
    %2372 = vmatprep.subr.bf16.mxu0 %v1996
    %2373 = vmatpush1.bf16.msra.mxu0 %v1995
    %2374 = vmatprep.subr.bf16.mxu0 %v2004
    %2375 = vmatpush1.bf16.msra.mxu0 %v2003
    %2376 = vmatprep.subr.bf16.mxu0 %v2012
    %2377 = vmatpush1.bf16.msra.mxu0 %v2011
    %2378 = vmatprep.subr.bf16.mxu0 %v2020
    %2379 = vmatpush1.bf16.msra.mxu0 %v2019
    %2380 = vmatprep.subr.bf16.mxu0 %v2028
    %2381 = vmatpush1.bf16.msra.mxu0 %v2027
    %2382 = vmatprep.subr.bf16.mxu0 %v2036
    %2383 = vmatpush1.bf16.msra.mxu0 %v2035
    %2384 = vmatprep.subr.bf16.mxu0 %v2044
    %2385 = vmatpush1.bf16.msra.mxu0 %v2043
    %2386 = vmatprep.subr.bf16.mxu0 %v2052
    %2387 = vmatpush1.bf16.msra.mxu0 %v2051
    %2388 = vmatprep.mubr.bf16.mxu0 %v736
    %2389 = vmatmul.mubr.bf16.gmra.mrb[0].mxu0 %v735
    %v2390 = vpop.f32.mrb[0].mxu0
    %v2391 = vadd.f32 %v2350, %v2390
    %v2392 = vpop.f32.mrb[0].mxu0
    %v2393 = vadd.f32 %v2352, %v2392
    %v2394 = vpop.f32.mrb[0].mxu0
    %v2395 = vpop.f32.mrb[0].mxu0
    %2396 = vdwg.mxu0
    %2397 = vmatprep.subr.bf16.mxu0 %v1806
    %2398 = vmatpush1.bf16.msra.mxu0 %v1805
    %2399 = vmatprep.subr.bf16.mxu0 %v1814
    %2400 = vmatpush1.bf16.msra.mxu0 %v1813
    %2401 = vmatprep.subr.bf16.mxu0 %v1822
    %2402 = vmatpush1.bf16.msra.mxu0 %v1821
    %2403 = vmatprep.subr.bf16.mxu0 %v1830
    %2404 = vmatpush1.bf16.msra.mxu0 %v1829
    %2405 = vmatprep.subr.bf16.mxu0 %v1838
    %2406 = vmatpush1.bf16.msra.mxu0 %v1837
    %2407 = vmatprep.subr.bf16.mxu0 %v1846
    %2408 = vmatpush1.bf16.msra.mxu0 %v1845
    %2409 = vmatprep.subr.bf16.mxu0 %v1854
    %2410 = vmatpush1.bf16.msra.mxu0 %v1853
    %2411 = vmatprep.subr.bf16.mxu0 %v1862
    %2412 = vmatpush1.bf16.msra.mxu0 %v1861
    %2413 = vmatprep.subr.bf16.mxu0 %v1870
    %2414 = vmatpush1.bf16.msra.mxu0 %v1869
    %2415 = vmatprep.subr.bf16.mxu0 %v1878
    %2416 = vmatpush1.bf16.msra.mxu0 %v1877
    %2417 = vmatprep.subr.bf16.mxu0 %v1886
    %2418 = vmatpush1.bf16.msra.mxu0 %v1885
    %2419 = vmatprep.subr.bf16.mxu0 %v1894
    %2420 = vmatpush1.bf16.msra.mxu0 %v1893
    %2421 = vmatprep.subr.bf16.mxu0 %v1902
    %2422 = vmatpush1.bf16.msra.mxu0 %v1901
    %2423 = vmatprep.subr.bf16.mxu0 %v1910
    %2424 = vmatpush1.bf16.msra.mxu0 %v1909
    %2425 = vmatprep.subr.bf16.mxu0 %v1918
    %2426 = vmatpush1.bf16.msra.mxu0 %v1917
    %2427 = vmatprep.subr.bf16.mxu0 %v1926
    %2428 = vmatpush1.bf16.msra.mxu0 %v1925
    %2429 = vmatprep.mubr.bf16.mxu0 %v734
    %2430 = vmatmul.mubr.bf16.gmra.mrb[0].mxu0 %v733
    %v2431 = vpop.f32.mrb[0].mxu0
    %v2432 = vadd.f32 %v1006, %v2431
    %v2433 = vpop.f32.mrb[0].mxu0
    %v2434 = vadd.f32 %v1010, %v2433
    %v2435 = vpop.f32.mrb[0].mxu0
    %v2436 = vpop.f32.mrb[0].mxu0
    %2437 = vdwg.mxu0
    %2438 = vmatprep.subr.bf16.mxu0 %v1934
    %2439 = vmatpush1.bf16.msra.mxu0 %v1933
    %2440 = vmatprep.subr.bf16.mxu0 %v1942
    %2441 = vmatpush1.bf16.msra.mxu0 %v1941
    %2442 = vmatprep.subr.bf16.mxu0 %v1950
    %2443 = vmatpush1.bf16.msra.mxu0 %v1949
    %2444 = vmatprep.subr.bf16.mxu0 %v1958
    %2445 = vmatpush1.bf16.msra.mxu0 %v1957
    %2446 = vmatprep.subr.bf16.mxu0 %v1966
    %2447 = vmatpush1.bf16.msra.mxu0 %v1965
    %2448 = vmatprep.subr.bf16.mxu0 %v1974
    %2449 = vmatpush1.bf16.msra.mxu0 %v1973
    %2450 = vmatprep.subr.bf16.mxu0 %v1982
    %2451 = vmatpush1.bf16.msra.mxu0 %v1981
    %2452 = vmatprep.subr.bf16.mxu0 %v1990
    %2453 = vmatpush1.bf16.msra.mxu0 %v1989
    %2454 = vmatprep.subr.bf16.mxu0 %v1998
    %2455 = vmatpush1.bf16.msra.mxu0 %v1997
    %2456 = vmatprep.subr.bf16.mxu0 %v2006
    %2457 = vmatpush1.bf16.msra.mxu0 %v2005
    %2458 = vmatprep.subr.bf16.mxu0 %v2014
    %2459 = vmatpush1.bf16.msra.mxu0 %v2013
    %2460 = vmatprep.subr.bf16.mxu0 %v2022
    %2461 = vmatpush1.bf16.msra.mxu0 %v2021
    %2462 = vmatprep.subr.bf16.mxu0 %v2030
    %2463 = vmatpush1.bf16.msra.mxu0 %v2029
    %2464 = vmatprep.subr.bf16.mxu0 %v2038
    %2465 = vmatpush1.bf16.msra.mxu0 %v2037
    %2466 = vmatprep.subr.bf16.mxu0 %v2046
    %2467 = vmatpush1.bf16.msra.mxu0 %v2045
    %2468 = vmatprep.subr.bf16.mxu0 %v2054
    %2469 = vmatpush1.bf16.msra.mxu0 %v2053
    %2470 = vmatprep.mubr.bf16.mxu0 %v736
    %2471 = vmatmul.mubr.bf16.gmra.mrb[0].mxu0 %v735
    %v2472 = vpop.f32.mrb[0].mxu0
    %v2473 = vadd.f32 %v2432, %v2472
    %v2474 = vpop.f32.mrb[0].mxu0
    %v2475 = vadd.f32 %v2434, %v2474
    %v2476 = vpop.f32.mrb[0].mxu0
    %v2477 = vpop.f32.mrb[0].mxu0
    %2478 = vdwg.mxu0
    %2479 = vmatprep.subr.bf16.mxu0 %v1808
    %2480 = vmatpush1.bf16.msra.mxu0 %v1807
    %2481 = vmatprep.subr.bf16.mxu0 %v1816
    %2482 = vmatpush1.bf16.msra.mxu0 %v1815
    %2483 = vmatprep.subr.bf16.mxu0 %v1824
    %2484 = vmatpush1.bf16.msra.mxu0 %v1823
    %2485 = vmatprep.subr.bf16.mxu0 %v1832
    %2486 = vmatpush1.bf16.msra.mxu0 %v1831
    %2487 = vmatprep.subr.bf16.mxu0 %v1840
    %2488 = vmatpush1.bf16.msra.mxu0 %v1839
    %2489 = vmatprep.subr.bf16.mxu0 %v1848
    %2490 = vmatpush1.bf16.msra.mxu0 %v1847
    %2491 = vmatprep.subr.bf16.mxu0 %v1856
    %2492 = vmatpush1.bf16.msra.mxu0 %v1855
    %2493 = vmatprep.subr.bf16.mxu0 %v1864
    %2494 = vmatpush1.bf16.msra.mxu0 %v1863
    %2495 = vmatprep.subr.bf16.mxu0 %v1872
    %2496 = vmatpush1.bf16.msra.mxu0 %v1871
    %2497 = vmatprep.subr.bf16.mxu0 %v1880
    %2498 = vmatpush1.bf16.msra.mxu0 %v1879
    %2499 = vmatprep.subr.bf16.mxu0 %v1888
    %2500 = vmatpush1.bf16.msra.mxu0 %v1887
    %2501 = vmatprep.subr.bf16.mxu0 %v1896
    %2502 = vmatpush1.bf16.msra.mxu0 %v1895
    %2503 = vmatprep.subr.bf16.mxu0 %v1904
    %2504 = vmatpush1.bf16.msra.mxu0 %v1903
    %2505 = vmatprep.subr.bf16.mxu0 %v1912
    %2506 = vmatpush1.bf16.msra.mxu0 %v1911
    %2507 = vmatprep.subr.bf16.mxu0 %v1920
    %2508 = vmatpush1.bf16.msra.mxu0 %v1919
    %2509 = vmatprep.subr.bf16.mxu0 %v1928
    %2510 = vmatpush1.bf16.msra.mxu0 %v1927
    %2511 = vmatprep.mubr.bf16.mxu0 %v734
    %2512 = vmatmul.mubr.bf16.gmra.mrb[0].mxu0 %v733
    %v2513 = vpop.f32.mrb[0].mxu0
    %v2514 = vadd.f32 %v1014, %v2513
    %v2515 = vpop.f32.mrb[0].mxu0
    %v2516 = vadd.f32 %v1018, %v2515
    %v2517 = vpop.f32.mrb[0].mxu0
    %v2518 = vpop.f32.mrb[0].mxu0
    %2519 = vdwg.mxu0
    %2520 = vmatprep.subr.bf16.mxu0 %v1936
    %2521 = vmatpush1.bf16.msra.mxu0 %v1935
    %2522 = vmatprep.subr.bf16.mxu0 %v1944
    %2523 = vmatpush1.bf16.msra.mxu0 %v1943
    %2524 = vmatprep.subr.bf16.mxu0 %v1952
    %2525 = vmatpush1.bf16.msra.mxu0 %v1951
    %2526 = vmatprep.subr.bf16.mxu0 %v1960
    %2527 = vmatpush1.bf16.msra.mxu0 %v1959
    %2528 = vmatprep.subr.bf16.mxu0 %v1968
    %2529 = vmatpush1.bf16.msra.mxu0 %v1967
    %2530 = vmatprep.subr.bf16.mxu0 %v1976
    %2531 = vmatpush1.bf16.msra.mxu0 %v1975
    %2532 = vmatprep.subr.bf16.mxu0 %v1984
    %2533 = vmatpush1.bf16.msra.mxu0 %v1983
    %2534 = vmatprep.subr.bf16.mxu0 %v1992
    %2535 = vmatpush1.bf16.msra.mxu0 %v1991
    %2536 = vmatprep.subr.bf16.mxu0 %v2000
    %2537 = vmatpush1.bf16.msra.mxu0 %v1999
    %2538 = vmatprep.subr.bf16.mxu0 %v2008
    %2539 = vmatpush1.bf16.msra.mxu0 %v2007
    %2540 = vmatprep.subr.bf16.mxu0 %v2016
    %2541 = vmatpush1.bf16.msra.mxu0 %v2015
    %2542 = vmatprep.subr.bf16.mxu0 %v2024
    %2543 = vmatpush1.bf16.msra.mxu0 %v2023
    %2544 = vmatprep.subr.bf16.mxu0 %v2032
    %2545 = vmatpush1.bf16.msra.mxu0 %v2031
    %2546 = vmatprep.subr.bf16.mxu0 %v2040
    %2547 = vmatpush1.bf16.msra.mxu0 %v2039
    %2548 = vmatprep.subr.bf16.mxu0 %v2048
    %2549 = vmatpush1.bf16.msra.mxu0 %v2047
    %2550 = vmatprep.subr.bf16.mxu0 %v2056
    %2551 = vmatpush1.bf16.msra.mxu0 %v2055
    %2552 = vmatprep.mubr.bf16.mxu0 %v736
    %2553 = vmatmul.mubr.bf16.gmra.mrb[0].mxu0 %v735
    %v2554 = vpop.f32.mrb[0].mxu0
    %v2555 = vadd.f32 %v2514, %v2554
    %v2556 = vpop.f32.mrb[0].mxu0
    %v2557 = vadd.f32 %v2516, %v2556
    %v2558 = vpop.f32.mrb[0].mxu0
    %v2559 = vpop.f32.mrb[0].mxu0
    %2560 = vdwg.mxu0
    %2561 = vmatprep.subr.bf16.mxu0 %v1810
    %2562 = vmatpush1.bf16.msra.mxu0 %v1809
    %2563 = vmatprep.subr.bf16.mxu0 %v1818
    %2564 = vmatpush1.bf16.msra.mxu0 %v1817
    %2565 = vmatprep.subr.bf16.mxu0 %v1826
    %2566 = vmatpush1.bf16.msra.mxu0 %v1825
    %2567 = vmatprep.subr.bf16.mxu0 %v1834
    %2568 = vmatpush1.bf16.msra.mxu0 %v1833
    %2569 = vmatprep.subr.bf16.mxu0 %v1842
    %2570 = vmatpush1.bf16.msra.mxu0 %v1841
    %2571 = vmatprep.subr.bf16.mxu0 %v1850
    %2572 = vmatpush1.bf16.msra.mxu0 %v1849
    %2573 = vmatprep.subr.bf16.mxu0 %v1858
    %2574 = vmatpush1.bf16.msra.mxu0 %v1857
    %2575 = vmatprep.subr.bf16.mxu0 %v1866
    %2576 = vmatpush1.bf16.msra.mxu0 %v1865
    %2577 = vmatprep.subr.bf16.mxu0 %v1874
    %2578 = vmatpush1.bf16.msra.mxu0 %v1873
    %2579 = vmatprep.subr.bf16.mxu0 %v1882
    %2580 = vmatpush1.bf16.msra.mxu0 %v1881
    %2581 = vmatprep.subr.bf16.mxu0 %v1890
    %2582 = vmatpush1.bf16.msra.mxu0 %v1889
    %2583 = vmatprep.subr.bf16.mxu0 %v1898
    %2584 = vmatpush1.bf16.msra.mxu0 %v1897
    %2585 = vmatprep.subr.bf16.mxu0 %v1906
    %2586 = vmatpush1.bf16.msra.mxu0 %v1905
    %2587 = vmatprep.subr.bf16.mxu0 %v1914
    %2588 = vmatpush1.bf16.msra.mxu0 %v1913
    %2589 = vmatprep.subr.bf16.mxu0 %v1922
    %2590 = vmatpush1.bf16.msra.mxu0 %v1921
    %2591 = vmatprep.subr.bf16.mxu0 %v1930
    %2592 = vmatpush1.bf16.msra.mxu0 %v1929
    %2593 = vmatprep.mubr.bf16.mxu0 %v734
    %2594 = vmatmul.mubr.bf16.gmra.mrb[0].mxu0 %v733
    %v2595 = vpop.f32.mrb[0].mxu0
    %v2596 = vadd.f32 %v1022, %v2595
    %v2597 = vpop.f32.mrb[0].mxu0
    %v2598 = vadd.f32 %v1026, %v2597
    %v2599 = vpop.f32.mrb[0].mxu0
    %v2600 = vpop.f32.mrb[0].mxu0
    %2601 = vdwg.mxu0
    %2602 = vmatprep.subr.bf16.mxu0 %v1938
    %2603 = vmatpush1.bf16.msra.mxu0 %v1937
    %2604 = vmatprep.subr.bf16.mxu0 %v1946
    %2605 = vmatpush1.bf16.msra.mxu0 %v1945
    %2606 = vmatprep.subr.bf16.mxu0 %v1954
    %2607 = vmatpush1.bf16.msra.mxu0 %v1953
    %2608 = vmatprep.subr.bf16.mxu0 %v1962
    %2609 = vmatpush1.bf16.msra.mxu0 %v1961
    %2610 = vmatprep.subr.bf16.mxu0 %v1970
    %2611 = vmatpush1.bf16.msra.mxu0 %v1969
    %2612 = vmatprep.subr.bf16.mxu0 %v1978
    %2613 = vmatpush1.bf16.msra.mxu0 %v1977
    %2614 = vmatprep.subr.bf16.mxu0 %v1986
    %2615 = vmatpush1.bf16.msra.mxu0 %v1985
    %2616 = vmatprep.subr.bf16.mxu0 %v1994
    %2617 = vmatpush1.bf16.msra.mxu0 %v1993
    %2618 = vmatprep.subr.bf16.mxu0 %v2002
    %2619 = vmatpush1.bf16.msra.mxu0 %v2001
    %2620 = vmatprep.subr.bf16.mxu0 %v2010
    %2621 = vmatpush1.bf16.msra.mxu0 %v2009
    %2622 = vmatprep.subr.bf16.mxu0 %v2018
    %2623 = vmatpush1.bf16.msra.mxu0 %v2017
    %2624 = vmatprep.subr.bf16.mxu0 %v2026
    %2625 = vmatpush1.bf16.msra.mxu0 %v2025
    %2626 = vmatprep.subr.bf16.mxu0 %v2034
    %2627 = vmatpush1.bf16.msra.mxu0 %v2033
    %2628 = vmatprep.subr.bf16.mxu0 %v2042
    %2629 = vmatpush1.bf16.msra.mxu0 %v2041
    %2630 = vmatprep.subr.bf16.mxu0 %v2050
    %2631 = vmatpush1.bf16.msra.mxu0 %v2049
    %2632 = vmatprep.subr.bf16.mxu0 %v2058
    %2633 = vmatpush1.bf16.msra.mxu0 %v2057
    %2634 = vmatprep.mubr.bf16.mxu0 %v736
    %2635 = vmatmul.mubr.bf16.gmra.mrb[0].mxu0 %v735
    %v2636 = vpop.f32.mrb[0].mxu0
    %v2637 = vadd.f32 %v2596, %v2636
    %v2638 = vpop.f32.mrb[0].mxu0
    %v2639 = vadd.f32 %v2598, %v2638
    %v2640 = vpop.f32.mrb[0].mxu0
    %v2641 = vpop.f32.mrb[0].mxu0
    %2642 = vdwg.mxu0
    %v2643 = vtanh.pop %v2391
    %v2644 = vtanh.pop %v2393
    %v2645 = vtanh.pop %v2473
    %v2646 = vtanh.pop %v2475
    %v2647 = vtanh.pop %v2555
    %v2648 = vtanh.pop %v2557
    %v2649 = vtanh.pop %v2637
    %v2650 = vtanh.pop %v2639
    %2651 = vst [vmem:[#allocation10] sm:$0xff] %v2643
    %2652 = vst [vmem:[#allocation10 + $0x8] sm:$0xff] %v2644
    %2653 = vst [vmem:[#allocation10 + $0x10] sm:$0xff] %v2645
    %2654 = vst [vmem:[#allocation10 + $0x18] sm:$0xff] %v2646
    %2655 = vst [vmem:[#allocation10 + $0x20] sm:$0xff] %v2647
    %2656 = vst [vmem:[#allocation10 + $0x28] sm:$0xff] %v2648
    %2657 = vst [vmem:[#allocation10 + $0x30] sm:$0xff] %v2649
    %vm2658 = vcmask 850944
    %2659 = vst.msk [vmem:[#allocation10 + $0x38] sm:$0xff] %vm2658, %v2650
    // Predicated region
    $region38: #{tpu_custom_call.1} parent=1 // pred_check
      _
    $region39: #{tpu_custom_call.1} parent=1 // pred_check_branch
      %2661 = sbr.rel (0) target = $region41
    $region40: #{tpu_custom_call.1} parent=1 // pred_region
      %s2663 = ssub.s32 1024, 1024
      %2664 = vsyncadd [#allocation4], %s2663
      %s2666 = sshll.u32 [#allocation10], 4
      %s2667 = int_to_ptr.vmem [resolvable:$true] %s2666
      %2669 = dma.vmem_to_hbm [thread:$0]  %s2667, 1024, %s5, [#allocation4]
    $region41: #{tpu_custom_call.1} parent=1 // pred_fallthru
      _
    // Predicated region
    $region42: #{tpu_custom_call.1} parent=1 // pred_check
      _
    $region43: #{tpu_custom_call.1} parent=1 // pred_check_branch
      %2671 = sbr.rel (0) target = $region45
    $region44: #{tpu_custom_call.1} parent=1 // pred_region
      %2672 = dma.done [#allocation4], 1024
    $region45: #{tpu_custom_call.1} parent=1 // pred_fallthru
      _
    %2673 = vsyncpa [#allocation3], 1
    %2674 = vsyncpa [#allocation6], 1
    %2675 = vsyncpa [#allocation9], 1
    %2676 = vsyncpa [#allocation4], 1

</llo_original>
